<compile_context>
chip_gen: v7x
topology: tpu7x:2x2x1
jax: 0.10.0
libtpu: 0.0.40
codegen_flags: <defaults>
</compile_context>

<pallas_src>
import functools

import jax
import jax.numpy as jnp
from jax.experimental import pallas as pl
from jax.experimental.pallas import tpu as pltpu


def _round_up(x, m):
    return ((x + m - 1) // m) * m


# ----------------------------------------------------------------------------
# Kernel
# ----------------------------------------------------------------------------
def _actor_kernel(mid_pad, hcat_pad, out_pad, out_sub_pad,
                  state_ref, w1_ref, w2_ref, w3_ref, w4_ref, b_ref, out_ref):
    # Trunk: two matmuls + bias + ReLU (f32 accumulation on the MXU).
    x = state_ref[...]
    h = jnp.dot(x, w1_ref[...], preferred_element_type=jnp.float32)
    h = jnp.maximum(h + b_ref[0:1, :mid_pad], 0.0)
    h = jnp.dot(h.astype(w2_ref.dtype), w2_ref[...],
                preferred_element_type=jnp.float32)
    h = jnp.maximum(h + b_ref[1:2, :mid_pad], 0.0)

    # All heads' hidden layers fused into one wide matmul: (bt, H*mid_pad).
    hh = jnp.dot(h.astype(w3_ref.dtype), w3_ref[...],
                 preferred_element_type=jnp.float32)
    hh = jnp.maximum(hh + b_ref[2:3, :hcat_pad], 0.0)

    # All heads' logits via one block-diagonal matmul, lane-padded to out_pad.
    logits = jnp.dot(hh.astype(w4_ref.dtype), w4_ref[...],
                     preferred_element_type=jnp.float32)
    logits = logits + b_ref[3:4, :out_pad]

    # Transposed store: batch becomes the dense 128-lane axis; only
    # out_sub_pad (= round_up(total_action, 8)) sublanes are written, killing
    # the 128-lane output-write amplification.  Transpose uses the XLU slot.
    logits_t = logits.T                                   # (out_pad, bt)
    out_ref[...] = logits_t[:out_sub_pad, :].astype(out_ref.dtype)


# ----------------------------------------------------------------------------
# Tiling policy
# ----------------------------------------------------------------------------
def _choose_tiling(batch):
    """Returns (batch_pad, bt). bt is a multiple of 128 whenever grid > 1."""
    batch_pad8 = _round_up(batch, 8)
    if batch_pad8 <= 128:
        # Tiny problem: one grid step covering everything (splitting sub-128
        # batches would force lane-masked output tiles for negligible work).
        return batch_pad8, batch_pad8
    if batch_pad8 <= 256:
        # Two 128-row lane-dense steps so both v7x TensorCores get work.
        return 256, 128
    # Large batch: 256-512 row tiles to amortize per-step overhead; always
    # >= 2 grid steps for the "parallel" axis (megacore sharding).
    bt = 512 if batch_pad8 >= 1024 else 256
    return _round_up(batch_pad8, bt), bt


# ----------------------------------------------------------------------------
# Wrapper
# ----------------------------------------------------------------------------
def multi_agent_actor_forward(state, packed, action_dim,
                              return_transposed_padded=False):
    """state: (batch, state_dim) f32; packed: output of pack_params().

    Returns (batch, sum(action_dim)) logits, or the raw transposed/padded
    (round_up(total_action, 8), batch_pad) kernel output if
    return_transposed_padded=True (lets downstream softmax/sampling consume it
    without an extra HBM round trip).
    """
    batch, state_dim = state.shape
    mid_pad = packed["w1"].shape[1]
    hcat_pad = packed["w3"].shape[1]
    out_pad = packed["w4"].shape[1]
    total_action = sum(action_dim)
    out_sub_pad = _round_up(total_action, 8)

    batch_pad, bt = _choose_tiling(batch)

    x = state.astype(packed["w1"].dtype)
    if batch_pad != batch:
        x = jnp.pad(x, ((0, batch_pad - batch), (0, 0)))

    kernel = functools.partial(_actor_kernel, mid_pad, hcat_pad, out_pad,
                               out_sub_pad)

    # Advisory cost estimate so XLA schedules neighbors around this call.
    flops = 2 * batch_pad * (state_dim * mid_pad + mid_pad * mid_pad
                             + mid_pad * hcat_pad + hcat_pad * out_pad)
    w_bytes = sum(int(packed[k].size) * packed[k].dtype.itemsize
                  for k in ("w1", "w2", "w3", "w4", "bias"))
    bytes_accessed = (int(x.size) * x.dtype.itemsize + w_bytes
                      + out_sub_pad * batch_pad * 4)
    cost = pl.CostEstimate(flops=int(flops), transcendentals=0,
                           bytes_accessed=int(bytes_accessed))

    # Explicit scoped-VMEM budget: 2x pipelined tiles + weights (x2 covers the
    # double-buffered fallback) + f32 intermediates, with generous headroom.
    tile_bytes = bt * state_dim * x.dtype.itemsize + out_sub_pad * bt * 4
    interm_bytes = bt * (2 * mid_pad + hcat_pad + 2 * out_pad) * 4
    vmem_est = 2 * tile_bytes + 2 * w_bytes + interm_bytes
    vmem_limit = int(min(100 * 2**20, max(32 * 2**20, 2 * vmem_est)))

    def _run(weight_mode):
        def wspec(shape):
            if weight_mode is None:
                return pl.BlockSpec(shape, lambda i: (0, 0))
            return pl.BlockSpec(shape, lambda i: (0, 0),
                                pipeline_mode=weight_mode)

        return pl.pallas_call(
            kernel,
            out_shape=jax.ShapeDtypeStruct((out_sub_pad, batch_pad),
                                           jnp.float32),
            grid=(batch_pad // bt,),
            in_specs=[
                pl.BlockSpec((bt, state_dim), lambda i: (i, 0)),   # state tile
                wspec(packed["w1"].shape),                         # W1
                wspec(packed["w2"].shape),                         # W2
                wspec(packed["w3"].shape),                         # W3 (fused)
                wspec(packed["w4"].shape),                         # W4 (blockdiag)
                wspec(packed["bias"].shape),                       # packed biases
            ],
            out_specs=pl.BlockSpec((out_sub_pad, bt), lambda i: (0, i)),
            compiler_params=pltpu.CompilerParams(
                dimension_semantics=("parallel",),
                vmem_limit_bytes=vmem_limit),
            cost_estimate=cost,
        )(x, packed["w1"], packed["w2"], packed["w3"], packed["w4"],
          packed["bias"])

    try:
        # Grid-invariant weights: single-buffered (halves weight VMEM).
        out_t = _run(pl.Buffered(1))
    except Exception:
        # Fallback for JAX builds that reject buffer_count=1: functionally
        # identical, just double-buffers the replicated weight blocks.
        out_t = _run(None)

    if return_transposed_padded:
        return out_t
    # Small post-kernel fixup on a (out_sub_pad, batch_pad) array (~16x smaller
    # than the old (batch_pad, 128) padded output).
    return out_t[:total_action, :batch].T


# ----------------------------------------------------------------------------
# Parameter construction / packing (one-time, outside the kernel)
# ----------------------------------------------------------------------------
def _orthogonal(key, shape, gain):
    # Deterministic orthogonal init (mimics torch.nn.init.orthogonal_).
    rows, cols = shape
    n = max(rows, cols)
    a = jax.random.normal(key, (n, n), dtype=jnp.float32)
    q, r = jnp.linalg.qr(a)
    q = q * jnp.sign(jnp.diag(r))
    return gain * q[:rows, :cols]


def init_params(key, state_dim, mid_dim, action_dim):
    """Per-layer params; weights stored (in, out) so the kernel does x @ W."""
    keys = jax.random.split(key, 4 + 3 * len(action_dim))
    k = iter(keys)

    def linear(kw, kb, fan_in, fan_out):
        # Matches torch.nn.Linear default: U(-1/sqrt(fan_in), 1/sqrt(fan_in)).
        bound = 1.0 / (fan_in ** 0.5)
        w = jax.random.uniform(kw, (fan_in, fan_out), jnp.float32, -bound, bound)
        b = jax.random.uniform(kb, (1, fan_out), jnp.float32, -bound, bound)
        return w, b

    w1, b1 = linear(next(k), next(k), state_dim, mid_dim)
    w2, b2 = linear(next(k), next(k), mid_dim, mid_dim)
    params = {"w1": w1, "b1": b1, "w2": w2, "b2": b2,
              "w3": [], "b3": [], "w4": [], "b4": []}
    for a_dim in action_dim:
        w3, b3 = linear(next(k), next(k), mid_dim, mid_dim)
        # layer_norm(layer, std=0.01): orthogonal weight (gain 0.01), bias 1e-6.
        w4 = _orthogonal(next(k), (mid_dim, a_dim), gain=0.01)
        b4 = jnp.full((1, a_dim), 1e-6, jnp.float32)
        params["w3"].append(w3)
        params["b3"].append(b3)
        params["w4"].append(w4)
        params["b4"].append(b4)
    return params


def pack_params(params, action_dim, compute_dtype=jnp.bfloat16):
    """Fuse per-head weights, lane-pad all dims to 128, pack biases.

    compute_dtype=jnp.bfloat16 (default) feeds the MXU native bf16 operands
    with f32 accumulation; pass jnp.float32 for tight-tolerance checking.
    Biases always stay f32 (bias-add/ReLU run on the VPU in f32).
    """
    state_dim, mid_dim = params["w1"].shape
    num_heads = len(action_dim)
    total_action = sum(action_dim)
    mid_pad = _round_up(mid_dim, 128)
    hcat_pad = num_heads * mid_pad
    out_pad = _round_up(total_action, 128)

    # Zero-padded trunk weights (padded rows/cols are exact zeros, so padded
    # activations stay exactly zero through ReLU).
    w1 = jnp.zeros((state_dim, mid_pad), jnp.float32)
    w1 = w1.at[:, :mid_dim].set(params["w1"])
    w2 = jnp.zeros((mid_pad, mid_pad), jnp.float32)
    w2 = w2.at[:mid_dim, :mid_dim].set(params["w2"])

    # Head hidden layers -> one wide GEMM; head output layers -> block-diag.
    # TODO(synk): at large num_heads*mid_dim the block-diagonal W4 carries
    # mostly zero MACs/VMEM; split the final GEMM per 128-lane output group.
    w3 = jnp.zeros((mid_pad, hcat_pad), jnp.float32)
    w4 = jnp.zeros((hcat_pad, out_pad), jnp.float32)
    b3 = jnp.zeros((hcat_pad,), jnp.float32)
    b4 = jnp.zeros((out_pad,), jnp.float32)
    off = 0
    for i, a_dim in enumerate(action_dim):
        c0 = i * mid_pad
        w3 = w3.at[:mid_dim, c0:c0 + mid_dim].set(params["w3"][i])
        b3 = b3.at[c0:c0 + mid_dim].set(params["b3"][i][0])
        w4 = w4.at[c0:c0 + mid_dim, off:off + a_dim].set(params["w4"][i])
        b4 = b4.at[off:off + a_dim].set(params["b4"][i][0])
        off += a_dim

    # All biases in one (8, bias_width) f32 buffer; every slice the kernel
    # takes (mid_pad / hcat_pad / out_pad) is a multiple of 128 lanes.
    bias_width = max(mid_pad, hcat_pad, out_pad)
    bias = jnp.zeros((8, bias_width), jnp.float32)
    bias = bias.at[0, :mid_dim].set(params["b1"][0])
    bias = bias.at[1, :mid_dim].set(params["b2"][0])
    bias = bias.at[2, :hcat_pad].set(b3)
    bias = bias.at[3, :out_pad].set(b4)

    return {
        "w1": w1.astype(compute_dtype),
        "w2": w2.astype(compute_dtype),
        "w3": w3.astype(compute_dtype),
        "w4": w4.astype(compute_dtype),
        "bias": bias,
    }


def forward_ref(state, params, action_dim):
    # Pure-JAX reference (unfused, per-head) for correctness check.
    h = jnp.maximum(state @ params["w1"] + params["b1"], 0.0)
    h = jnp.maximum(h @ params["w2"] + params["b2"], 0.0)
    outs = []
    for i in range(len(action_dim)):
        hh = jnp.maximum(h @ params["w3"][i] + params["b3"][i], 0.0)
        outs.append(hh @ params["w4"][i] + params["b4"][i])
    return jnp.concatenate(outs, axis=1)


if __name__ == "__main__":
    # Small shapes consistent with the module's forward pass.
    batch = 8
    state_dim = 16
    mid_dim = 32
    action_dim = (5, 3)   # Multi-discrete: two heads -> output (batch, 8)

    key = jax.random.PRNGKey(0)
    k_state, k_params, k_big = jax.random.split(key, 3)
    state = jax.random.normal(k_state, (batch, state_dim), dtype=jnp.float32)
    params = init_params(k_params, state_dim, mid_dim, action_dim)
    ref = forward_ref(state, params, action_dim)

    # f32 compute path: tight tolerance against the reference.
    packed_f32 = pack_params(params, action_dim, compute_dtype=jnp.float32)
    out = multi_agent_actor_forward(state, packed_f32, action_dim)
    out = jax.block_until_ready(out)
    assert out.shape == (batch, sum(action_dim))
    assert jnp.allclose(out, ref, atol=1e-5, rtol=1e-5)

    # Larger batch exercises the multi-step "parallel" grid + batch padding.
    big_batch = 300
    state_big = jax.random.normal(k_big, (big_batch, state_dim), jnp.float32)
    out_big = jax.block_until_ready(
        multi_agent_actor_forward(state_big, packed_f32, action_dim))
    ref_big = forward_ref(state_big, params, action_dim)
    assert out_big.shape == (big_batch, sum(action_dim))
    assert jnp.allclose(out_big, ref_big, atol=1e-5, rtol=1e-5)

    # Default bf16 MXU-operand path (f32 accumulation): looser tolerance.
    packed_bf16 = pack_params(params, action_dim)
    out_bf16 = jax.block_until_ready(
        multi_agent_actor_forward(state, packed_bf16, action_dim))
    assert jnp.allclose(out_bf16, ref, atol=5e-2, rtol=5e-2)

    # get_action / get_logprob_entropy build softmax / Categorical math and
    # multinomial sampling on top of forward(); only forward() is the hot
    # compute path implemented as a kernel.
    # TODO(synk): stochastic action sampling (torch.multinomial) and
    #             Categorical log_prob/entropy are not fused into the kernel.
    print("KERNEL_OK")
</pallas_src>

<mosaic_0001>
module attributes {stable_mosaic.version = 11 : i64} {
  func.func @_actor_kernel(%arg0: i32, %arg1: memref<8x16xf32, #tpu.memory_space<vmem>>, %arg2: memref<16x128xf32, #tpu.memory_space<vmem>>, %arg3: memref<128x128xf32, #tpu.memory_space<vmem>>, %arg4: memref<128x256xf32, #tpu.memory_space<vmem>>, %arg5: memref<256x128xf32, #tpu.memory_space<vmem>>, %arg6: memref<8x256xf32, #tpu.memory_space<vmem>>, %arg7: memref<8x8xf32, #tpu.memory_space<vmem>>) attributes {dimension_semantics = [#tpu.dimension_semantics<parallel>], iteration_bounds = array<i64: 1>, scalar_prefetch = 0 : i64, scratch_operands = 0 : i64, tpu.core_type = #tpu.core_type<tc>, window_params = [{transform_indices = @transform_0, window_bounds = array<i64: 8, 16>}, {pipeline_mode = #tpu.pipeline_mode<synchronous>, transform_indices = @transform_1, window_bounds = array<i64: 16, 128>}, {pipeline_mode = #tpu.pipeline_mode<synchronous>, transform_indices = @transform_2, window_bounds = array<i64: 128, 128>}, {pipeline_mode = #tpu.pipeline_mode<synchronous>, transform_indices = @transform_3, window_bounds = array<i64: 128, 256>}, {pipeline_mode = #tpu.pipeline_mode<synchronous>, transform_indices = @transform_4, window_bounds = array<i64: 256, 128>}, {pipeline_mode = #tpu.pipeline_mode<synchronous>, transform_indices = @transform_5, window_bounds = array<i64: 8, 256>}, {transform_indices = @transform_6, window_bounds = array<i64: 8, 8>}]} {
    %c0 = arith.constant 0 : index
    %c0_0 = arith.constant 0 : index
    %0 = vector.load %arg1[%c0, %c0_0] : memref<8x16xf32, #tpu.memory_space<vmem>>, vector<8x16xf32>
    %c0_1 = arith.constant 0 : index
    %c0_2 = arith.constant 0 : index
    %1 = vector.load %arg2[%c0_1, %c0_2] : memref<16x128xf32, #tpu.memory_space<vmem>>, vector<16x128xf32>
    %cst = arith.constant dense<0.000000e+00> : vector<8x128xf32>
    %2 = tpu.matmul %0, %1, %cst {dimension_numbers = #tpu.dot_dimension_numbers<[1], [0], [0], [1], [0, 0, 1, 1], [], []>} : vector<8x16xf32>, vector<16x128xf32>, vector<8x128xf32> -> vector<8x128xf32>
    %c0_3 = arith.constant 0 : index
    %c0_4 = arith.constant 0 : index
    %3 = vector.load %arg6[%c0_3, %c0_4] : memref<8x256xf32, #tpu.memory_space<vmem>>, vector<1x128xf32>
    %4 = vector.broadcast %3 : vector<1x128xf32> to vector<8x128xf32>
    %5 = arith.addf %2, %4 : vector<8x128xf32>
    %cst_5 = arith.constant 0.000000e+00 : f32
    %6 = vector.broadcast %cst_5 : f32 to vector<8x128xf32>
    %7 = arith.maximumf %5, %6 : vector<8x128xf32>
    %c0_6 = arith.constant 0 : index
    %c0_7 = arith.constant 0 : index
    %8 = vector.load %arg3[%c0_6, %c0_7] : memref<128x128xf32, #tpu.memory_space<vmem>>, vector<128x128xf32>
    %cst_8 = arith.constant dense<0.000000e+00> : vector<8x128xf32>
    %9 = tpu.matmul %7, %8, %cst_8 {dimension_numbers = #tpu.dot_dimension_numbers<[1], [0], [0], [1], [0, 0, 1, 1], [], []>} : vector<8x128xf32>, vector<128x128xf32>, vector<8x128xf32> -> vector<8x128xf32>
    %c1 = arith.constant 1 : index
    %c0_9 = arith.constant 0 : index
    %10 = vector.load %arg6[%c1, %c0_9] : memref<8x256xf32, #tpu.memory_space<vmem>>, vector<1x128xf32>
    %11 = vector.broadcast %10 : vector<1x128xf32> to vector<8x128xf32>
    %12 = arith.addf %9, %11 : vector<8x128xf32>
    %cst_10 = arith.constant 0.000000e+00 : f32
    %13 = vector.broadcast %cst_10 : f32 to vector<8x128xf32>
    %14 = arith.maximumf %12, %13 : vector<8x128xf32>
    %c0_11 = arith.constant 0 : index
    %c0_12 = arith.constant 0 : index
    %15 = vector.load %arg4[%c0_11, %c0_12] : memref<128x256xf32, #tpu.memory_space<vmem>>, vector<128x256xf32>
    %cst_13 = arith.constant dense<0.000000e+00> : vector<8x256xf32>
    %16 = tpu.matmul %14, %15, %cst_13 {dimension_numbers = #tpu.dot_dimension_numbers<[1], [0], [0], [1], [0, 0, 1, 1], [], []>} : vector<8x128xf32>, vector<128x256xf32>, vector<8x256xf32> -> vector<8x256xf32>
    %c2 = arith.constant 2 : index
    %c0_14 = arith.constant 0 : index
    %17 = vector.load %arg6[%c2, %c0_14] : memref<8x256xf32, #tpu.memory_space<vmem>>, vector<1x256xf32>
    %18 = vector.broadcast %17 : vector<1x256xf32> to vector<8x256xf32>
    %19 = arith.addf %16, %18 : vector<8x256xf32>
    %cst_15 = arith.constant 0.000000e+00 : f32
    %20 = vector.broadcast %cst_15 : f32 to vector<8x256xf32>
    %21 = arith.maximumf %19, %20 : vector<8x256xf32>
    %c0_16 = arith.constant 0 : index
    %c0_17 = arith.constant 0 : index
    %22 = vector.load %arg5[%c0_16, %c0_17] : memref<256x128xf32, #tpu.memory_space<vmem>>, vector<256x128xf32>
    %cst_18 = arith.constant dense<0.000000e+00> : vector<8x128xf32>
    %23 = tpu.matmul %21, %22, %cst_18 {dimension_numbers = #tpu.dot_dimension_numbers<[1], [0], [0], [1], [0, 0, 1, 1], [], []>} : vector<8x256xf32>, vector<256x128xf32>, vector<8x128xf32> -> vector<8x128xf32>
    %c3 = arith.constant 3 : index
    %c0_19 = arith.constant 0 : index
    %24 = vector.load %arg6[%c3, %c0_19] : memref<8x256xf32, #tpu.memory_space<vmem>>, vector<1x128xf32>
    %25 = vector.broadcast %24 : vector<1x128xf32> to vector<8x128xf32>
    %26 = arith.addf %23, %25 : vector<8x128xf32>
    %27 = tpu.transpose %26, [1, 0] : vector<8x128xf32> -> vector<128x8xf32>
    %28 = vector.extract_strided_slice %27 {offsets = [0, 0], sizes = [8, 8], strides = [1, 1]} : vector<128x8xf32> to vector<8x8xf32>
    %c0_20 = arith.constant 0 : index
    %c0_21 = arith.constant 0 : index
    %29 = vector.load %arg7[%c0_20, %c0_21] : memref<8x8xf32, #tpu.memory_space<vmem>>, vector<8x8xf32>
    tpu.vector_store %arg7[%c0_20, %c0_21], %28 {strides = array<i32>} : memref<8x8xf32, #tpu.memory_space<vmem>>, vector<8x8xf32>,
    return
  }
  func.func @transform_0(%arg0: i32) -> (i32, i32) {
    %c0_i32 = arith.constant 0 : i32
    %c0_i32_0 = arith.constant 0 : i32
    return %arg0, %c0_i32 : i32, i32
  }
  func.func @transform_1(%arg0: i32) -> (i32, i32) {
    %c0_i32 = arith.constant 0 : i32
    %c0_i32_0 = arith.constant 0 : i32
    %c0_i32_1 = arith.constant 0 : i32
    return %c0_i32, %c0_i32_0 : i32, i32
  }
  func.func @transform_2(%arg0: i32) -> (i32, i32) {
    %c0_i32 = arith.constant 0 : i32
    %c0_i32_0 = arith.constant 0 : i32
    %c0_i32_1 = arith.constant 0 : i32
    return %c0_i32, %c0_i32_0 : i32, i32
  }
  func.func @transform_3(%arg0: i32) -> (i32, i32) {
    %c0_i32 = arith.constant 0 : i32
    %c0_i32_0 = arith.constant 0 : i32
    %c0_i32_1 = arith.constant 0 : i32
    return %c0_i32, %c0_i32_0 : i32, i32
  }
  func.func @transform_4(%arg0: i32) -> (i32, i32) {
    %c0_i32 = arith.constant 0 : i32
    %c0_i32_0 = arith.constant 0 : i32
    %c0_i32_1 = arith.constant 0 : i32
    return %c0_i32, %c0_i32_0 : i32, i32
  }
  func.func @transform_5(%arg0: i32) -> (i32, i32) {
    %c0_i32 = arith.constant 0 : i32
    %c0_i32_0 = arith.constant 0 : i32
    %c0_i32_1 = arith.constant 0 : i32
    return %c0_i32, %c0_i32_0 : i32, i32
  }
  func.func @transform_6(%arg0: i32) -> (i32, i32) {
    %c0_i32 = arith.constant 0 : i32
    %c0_i32_0 = arith.constant 0 : i32
    return %c0_i32, %arg0 : i32, i32
  }
}

module attributes {stable_mosaic.version = 11 : i64} {
  func.func @_actor_kernel(%arg0: i32, %arg1: memref<8x16xf32, #tpu.memory_space<vmem>>, %arg2: memref<16x128xf32, #tpu.memory_space<vmem>>, %arg3: memref<128x128xf32, #tpu.memory_space<vmem>>, %arg4: memref<128x256xf32, #tpu.memory_space<vmem>>, %arg5: memref<256x128xf32, #tpu.memory_space<vmem>>, %arg6: memref<8x256xf32, #tpu.memory_space<vmem>>, %arg7: memref<8x8xf32, #tpu.memory_space<vmem>>) attributes {dimension_semantics = [#tpu.dimension_semantics<parallel>], iteration_bounds = array<i64: 1>, scalar_prefetch = 0 : i64, scratch_operands = 0 : i64, tpu.core_type = #tpu.core_type<tc>, window_params = [{transform_indices = @transform_0, window_bounds = array<i64: 8, 16>}, {pipeline_mode = #tpu.pipeline_mode<synchronous>, transform_indices = @transform_1, window_bounds = array<i64: 16, 128>}, {pipeline_mode = #tpu.pipeline_mode<synchronous>, transform_indices = @transform_2, window_bounds = array<i64: 128, 128>}, {pipeline_mode = #tpu.pipeline_mode<synchronous>, transform_indices = @transform_3, window_bounds = array<i64: 128, 256>}, {pipeline_mode = #tpu.pipeline_mode<synchronous>, transform_indices = @transform_4, window_bounds = array<i64: 256, 128>}, {pipeline_mode = #tpu.pipeline_mode<synchronous>, transform_indices = @transform_5, window_bounds = array<i64: 8, 256>}, {transform_indices = @transform_6, window_bounds = array<i64: 8, 8>}]} {
    %c0 = arith.constant 0 : index
    %c0_0 = arith.constant 0 : index
    %0 = vector.load %arg1[%c0, %c0_0] : memref<8x16xf32, #tpu.memory_space<vmem>>, vector<8x16xf32>
    %c0_1 = arith.constant 0 : index
    %c0_2 = arith.constant 0 : index
    %1 = vector.load %arg2[%c0_1, %c0_2] : memref<16x128xf32, #tpu.memory_space<vmem>>, vector<16x128xf32>
    %cst = arith.constant dense<0.000000e+00> : vector<8x128xf32>
    %2 = tpu.matmul %0, %1, %cst {dimension_numbers = #tpu.dot_dimension_numbers<[1], [0], [0], [1], [0, 0, 1, 1], [], []>} : vector<8x16xf32>, vector<16x128xf32>, vector<8x128xf32> -> vector<8x128xf32>
    %c0_3 = arith.constant 0 : index
    %c0_4 = arith.constant 0 : index
    %3 = vector.load %arg6[%c0_3, %c0_4] : memref<8x256xf32, #tpu.memory_space<vmem>>, vector<1x128xf32>
    %4 = vector.broadcast %3 : vector<1x128xf32> to vector<8x128xf32>
    %5 = arith.addf %2, %4 : vector<8x128xf32>
    %cst_5 = arith.constant 0.000000e+00 : f32
    %6 = vector.broadcast %cst_5 : f32 to vector<8x128xf32>
    %7 = arith.maximumf %5, %6 : vector<8x128xf32>
    %c0_6 = arith.constant 0 : index
    %c0_7 = arith.constant 0 : index
    %8 = vector.load %arg3[%c0_6, %c0_7] : memref<128x128xf32, #tpu.memory_space<vmem>>, vector<128x128xf32>
    %cst_8 = arith.constant dense<0.000000e+00> : vector<8x128xf32>
    %9 = tpu.matmul %7, %8, %cst_8 {dimension_numbers = #tpu.dot_dimension_numbers<[1], [0], [0], [1], [0, 0, 1, 1], [], []>} : vector<8x128xf32>, vector<128x128xf32>, vector<8x128xf32> -> vector<8x128xf32>
    %c1 = arith.constant 1 : index
    %c0_9 = arith.constant 0 : index
    %10 = vector.load %arg6[%c1, %c0_9] : memref<8x256xf32, #tpu.memory_space<vmem>>, vector<1x128xf32>
    %11 = vector.broadcast %10 : vector<1x128xf32> to vector<8x128xf32>
    %12 = arith.addf %9, %11 : vector<8x128xf32>
    %cst_10 = arith.constant 0.000000e+00 : f32
    %13 = vector.broadcast %cst_10 : f32 to vector<8x128xf32>
    %14 = arith.maximumf %12, %13 : vector<8x128xf32>
    %c0_11 = arith.constant 0 : index
    %c0_12 = arith.constant 0 : index
    %15 = vector.load %arg4[%c0_11, %c0_12] : memref<128x256xf32, #tpu.memory_space<vmem>>, vector<128x256xf32>
    %cst_13 = arith.constant dense<0.000000e+00> : vector<8x256xf32>
    %16 = tpu.matmul %14, %15, %cst_13 {dimension_numbers = #tpu.dot_dimension_numbers<[1], [0], [0], [1], [0, 0, 1, 1], [], []>} : vector<8x128xf32>, vector<128x256xf32>, vector<8x256xf32> -> vector<8x256xf32>
    %c2 = arith.constant 2 : index
    %c0_14 = arith.constant 0 : index
    %17 = vector.load %arg6[%c2, %c0_14] : memref<8x256xf32, #tpu.memory_space<vmem>>, vector<1x256xf32>
    %18 = vector.broadcast %17 : vector<1x256xf32> to vector<8x256xf32>
    %19 = arith.addf %16, %18 : vector<8x256xf32>
    %cst_15 = arith.constant 0.000000e+00 : f32
    %20 = vector.broadcast %cst_15 : f32 to vector<8x256xf32>
    %21 = arith.maximumf %19, %20 : vector<8x256xf32>
    %c0_16 = arith.constant 0 : index
    %c0_17 = arith.constant 0 : index
    %22 = vector.load %arg5[%c0_16, %c0_17] : memref<256x128xf32, #tpu.memory_space<vmem>>, vector<256x128xf32>
    %cst_18 = arith.constant dense<0.000000e+00> : vector<8x128xf32>
    %23 = tpu.matmul %21, %22, %cst_18 {dimension_numbers = #tpu.dot_dimension_numbers<[1], [0], [0], [1], [0, 0, 1, 1], [], []>} : vector<8x256xf32>, vector<256x128xf32>, vector<8x128xf32> -> vector<8x128xf32>
    %c3 = arith.constant 3 : index
    %c0_19 = arith.constant 0 : index
    %24 = vector.load %arg6[%c3, %c0_19] : memref<8x256xf32, #tpu.memory_space<vmem>>, vector<1x128xf32>
    %25 = vector.broadcast %24 : vector<1x128xf32> to vector<8x128xf32>
    %26 = arith.addf %23, %25 : vector<8x128xf32>
    %27 = tpu.transpose %26, [1, 0] : vector<8x128xf32> -> vector<128x8xf32>
    %28 = vector.extract_strided_slice %27 {offsets = [0, 0], sizes = [8, 8], strides = [1, 1]} : vector<128x8xf32> to vector<8x8xf32>
    %c0_20 = arith.constant 0 : index
    %c0_21 = arith.constant 0 : index
    %29 = vector.load %arg7[%c0_20, %c0_21] : memref<8x8xf32, #tpu.memory_space<vmem>>, vector<8x8xf32>
    tpu.vector_store %arg7[%c0_20, %c0_21], %28 {strides = array<i32>} : memref<8x8xf32, #tpu.memory_space<vmem>>, vector<8x8xf32>,
    return
  }
  func.func @transform_0(%arg0: i32) -> (i32, i32) {
    %c0_i32 = arith.constant 0 : i32
    %c0_i32_0 = arith.constant 0 : i32
    return %arg0, %c0_i32 : i32, i32
  }
  func.func @transform_1(%arg0: i32) -> (i32, i32) {
    %c0_i32 = arith.constant 0 : i32
    %c0_i32_0 = arith.constant 0 : i32
    %c0_i32_1 = arith.constant 0 : i32
    return %c0_i32, %c0_i32_0 : i32, i32
  }
  func.func @transform_2(%arg0: i32) -> (i32, i32) {
    %c0_i32 = arith.constant 0 : i32
    %c0_i32_0 = arith.constant 0 : i32
    %c0_i32_1 = arith.constant 0 : i32
    return %c0_i32, %c0_i32_0 : i32, i32
  }
  func.func @transform_3(%arg0: i32) -> (i32, i32) {
    %c0_i32 = arith.constant 0 : i32
    %c0_i32_0 = arith.constant 0 : i32
    %c0_i32_1 = arith.constant 0 : i32
    return %c0_i32, %c0_i32_0 : i32, i32
  }
  func.func @transform_4(%arg0: i32) -> (i32, i32) {
    %c0_i32 = arith.constant 0 : i32
    %c0_i32_0 = arith.constant 0 : i32
    %c0_i32_1 = arith.constant 0 : i32
    return %c0_i32, %c0_i32_0 : i32, i32
  }
  func.func @transform_5(%arg0: i32) -> (i32, i32) {
    %c0_i32 = arith.constant 0 : i32
    %c0_i32_0 = arith.constant 0 : i32
    %c0_i32_1 = arith.constant 0 : i32
    return %c0_i32, %c0_i32_0 : i32, i32
  }
  func.func @transform_6(%arg0: i32) -> (i32, i32) {
    %c0_i32 = arith.constant 0 : i32
    %c0_i32_0 = arith.constant 0 : i32
    return %c0_i32, %arg0 : i32, i32
  }
}

</mosaic_0001>

<llo_original>
// kernel: tpu_custom_call.1
$region0: #{tpu_custom_call.1}
  #allocation0 [shape = 'u32[]', space=smem, size = 0x4, offset = 0x4, fixed_abs, tag = 'smem constant byte address 0x4 - core index']
  #allocation1 [shape = 'u32[144,128]{1,0:T(1,128)}', space=vmem, size = 0x12000, scoped, tag = 'internal scratch']
  %s0 = inlined_call_operand.hbm [shape: f32[8,16], index: 0, kind: input, shape index: {}]
  %s1 = inlined_call_operand.hbm [shape: f32[16,128], index: 1, kind: input, shape index: {}]
  %s2 = inlined_call_operand.hbm [shape: f32[128,128], index: 2, kind: input, shape index: {}]
  %s3 = inlined_call_operand.hbm [shape: f32[128,256], index: 3, kind: input, shape index: {}]
  %s4 = inlined_call_operand.hbm [shape: f32[256,128], index: 4, kind: input, shape index: {}]
  %s5 = inlined_call_operand.vmem [shape: f32[8,256], index: 5, kind: input, shape index: {}]
  %s6 = inlined_call_operand.hbm [shape: f32[8,8], index: 6, kind: output, shape index: {}]
  %s7 = sld [smem:[#allocation0]]
  $region54: #{tpu_custom_call.1} parent=0
    _
  %s9 = ssub.s32 1, %s7
  %s10 = scalar_select 0, %s9, %s7
  $region1: #{tpu_custom_call.1} parent=0
    #allocation2 [shape = 'u8[4096]{0}', space=vmem, size = 0x1000, scoped, tag = 'input window, operand 0, single buffered']
    #allocation3 [shape = 's32[1]{0}', space=sflag, size = 0x4, scoped, tag = 'scoped memory for tpu_custom_call.1']
    #allocation4 [shape = 's32[1]{0}', space=sflag, size = 0x4, scoped, tag = 'scoped memory for tpu_custom_call.1']
    #allocation5 [shape = 'u8[8192]{0}', space=vmem, size = 0x2000, scoped, tag = 'input window, operand 1, single buffered']
    #allocation6 [shape = 's32[1]{0}', space=sflag, size = 0x4, scoped, tag = 'scoped memory for tpu_custom_call.1']
    #allocation7 [shape = 'u8[65536]{0}', space=vmem, size = 0x10000, scoped, tag = 'input window, operand 2, single buffered']
    #allocation8 [shape = 'u8[131072]{0}', space=vmem, size = 0x20000, scoped, tag = 'input window, operand 3, single buffered']
    #allocation9 [shape = 's32[1]{0}', space=sflag, size = 0x4, scoped, tag = 'scoped memory for tpu_custom_call.1']
    #allocation10 [shape = 'u8[131072]{0}', space=vmem, size = 0x20000, scoped, tag = 'input window, operand 4, single buffered']
    #allocation11 [shape = 'u8[4096]{0}', space=vmem, size = 0x1000, scoped, tag = 'output window, operand 0, single buffered']
    %11 = vsyncpa [#allocation3], 0
    %12 = vsyncpa [#allocation6], 0
    %13 = vsyncpa [#allocation9], 0
    %14 = vsyncpa [#allocation4], 0
    // Predicated region
    $region2: #{tpu_custom_call.1} parent=1 // pred_check
      _
    $region3: #{tpu_custom_call.1} parent=1 // pred_check_branch
      %16 = sbr.rel (0) target = $region5
    $region4: #{tpu_custom_call.1} parent=1 // pred_region
      %s18 = ssub.s32 128, 128
      %19 = vsyncadd [#allocation3], %s18
      %s21 = sshll.u32 [#allocation2], 4
      %s22 = int_to_ptr.vmem [resolvable:$true] %s21
      %24 = dma.hbm_to_vmem [thread:$0]  %s0, 128, %s22, [#allocation3]
    $region5: #{tpu_custom_call.1} parent=1 // pred_fallthru
      _
    // Predicated region
    $region6: #{tpu_custom_call.1} parent=1 // pred_check
      _
    $region7: #{tpu_custom_call.1} parent=1 // pred_check_branch
      %26 = sbr.rel (0) target = $region9
    $region8: #{tpu_custom_call.1} parent=1 // pred_region
      %s28 = ssub.s32 256, 256
      %29 = vsyncadd [#allocation6], %s28
      %s30 = sshll.u32 [#allocation5], 4
      %s31 = int_to_ptr.vmem [resolvable:$true] %s30
      %36 = dma.hbm_to_vmem [thread:$0]  %s1, 256, %s31, [#allocation6], 128, 128, 8
    $region9: #{tpu_custom_call.1} parent=1 // pred_fallthru
      _
    // Predicated region
    $region10: #{tpu_custom_call.1} parent=1 // pred_check
      _
    $region11: #{tpu_custom_call.1} parent=1 // pred_check_branch
      %38 = sbr.rel (0) target = $region13
    $region12: #{tpu_custom_call.1} parent=1 // pred_region
      %s40 = ssub.s32 2048, 2048
      %41 = vsyncadd [#allocation6], %s40
      %s42 = sshll.u32 [#allocation7], 4
      %s43 = int_to_ptr.vmem [resolvable:$true] %s42
      %48 = dma.hbm_to_vmem [thread:$0]  %s2, 2048, %s43, [#allocation6], 128, 128, 8
    $region13: #{tpu_custom_call.1} parent=1 // pred_fallthru
      _
    // Predicated region
    $region14: #{tpu_custom_call.1} parent=1 // pred_check
      _
    $region15: #{tpu_custom_call.1} parent=1 // pred_check_branch
      %50 = sbr.rel (0) target = $region17
    $region16: #{tpu_custom_call.1} parent=1 // pred_region
      %s52 = ssub.s32 4096, 4096
      %53 = vsyncadd [#allocation9], %s52
      %s54 = sshll.u32 [#allocation8], 4
      %s55 = int_to_ptr.vmem [resolvable:$true] %s54
      %60 = dma.hbm_to_vmem [thread:$0]  %s3, 4096, %s55, [#allocation9], 256, 256, 16
    $region17: #{tpu_custom_call.1} parent=1 // pred_fallthru
      _
    // Predicated region
    $region18: #{tpu_custom_call.1} parent=1 // pred_check
      _
    $region19: #{tpu_custom_call.1} parent=1 // pred_check_branch
      %62 = sbr.rel (0) target = $region21
    $region20: #{tpu_custom_call.1} parent=1 // pred_region
      %s64 = ssub.s32 4096, 4096
      %65 = vsyncadd [#allocation9], %s64
      %s66 = sshll.u32 [#allocation10], 4
      %s67 = int_to_ptr.vmem [resolvable:$true] %s66
      %72 = dma.hbm_to_vmem [thread:$0]  %s4, 4096, %s67, [#allocation9], 128, 128, 8
    $region21: #{tpu_custom_call.1} parent=1 // pred_fallthru
      _
    // Predicated region
    $region22: #{tpu_custom_call.1} parent=1 // pred_check
      _
    $region23: #{tpu_custom_call.1} parent=1 // pred_check_branch
      %74 = sbr.rel (0) target = $region25
    $region24: #{tpu_custom_call.1} parent=1 // pred_region
      _
    $region25: #{tpu_custom_call.1} parent=1 // pred_fallthru
      _
    // Predicated region
    $region26: #{tpu_custom_call.1} parent=1 // pred_check
      _
    $region27: #{tpu_custom_call.1} parent=1 // pred_check_branch
      %76 = sbr.rel (0) target = $region29
    $region28: #{tpu_custom_call.1} parent=1 // pred_region
      %77 = dma.done [#allocation3], 128
    $region29: #{tpu_custom_call.1} parent=1 // pred_fallthru
      _
    // Predicated region
    $region30: #{tpu_custom_call.1} parent=1 // pred_check
      _
    $region31: #{tpu_custom_call.1} parent=1 // pred_check_branch
      %79 = sbr.rel (0) target = $region33
    $region32: #{tpu_custom_call.1} parent=1 // pred_region
      %80 = dma.done [#allocation6], 256
    $region33: #{tpu_custom_call.1} parent=1 // pred_fallthru
      _
    // Predicated region
    $region34: #{tpu_custom_call.1} parent=1 // pred_check
      _
    $region35: #{tpu_custom_call.1} parent=1 // pred_check_branch
      %82 = sbr.rel (0) target = $region37
    $region36: #{tpu_custom_call.1} parent=1 // pred_region
      %83 = dma.done [#allocation6], 2048
    $region37: #{tpu_custom_call.1} parent=1 // pred_fallthru
      _
    // Predicated region
    $region38: #{tpu_custom_call.1} parent=1 // pred_check
      _
    $region39: #{tpu_custom_call.1} parent=1 // pred_check_branch
      %85 = sbr.rel (0) target = $region41
    $region40: #{tpu_custom_call.1} parent=1 // pred_region
      %86 = dma.done [#allocation9], 4096
    $region41: #{tpu_custom_call.1} parent=1 // pred_fallthru
      _
    // Predicated region
    $region42: #{tpu_custom_call.1} parent=1 // pred_check
      _
    $region43: #{tpu_custom_call.1} parent=1 // pred_check_branch
      %88 = sbr.rel (0) target = $region45
    $region44: #{tpu_custom_call.1} parent=1 // pred_region
      %89 = dma.done [#allocation9], 4096
    $region45: #{tpu_custom_call.1} parent=1 // pred_fallthru
      _
    %v90 = vld [vmem:[#allocation2] sm:$0xff]
    %v91 = vld [vmem:[#allocation5] sm:$0xff]
    %v92 = vld [vmem:[#allocation5 + $0x8] sm:$0xff]
    %v93 = vld [vmem:[%s5] ss:$0 sm:$0xff]
    %vm94 = vcmask 130048
    %v96 = vsel %vm94, %v90, 0
    %98 = vmatprep.subr.mxu0 0.0
    %99 = vmatpush1.msra.mxu0 %v91
    %100 = vmatprep.subr.mxu0 0.0
    %101 = vmatpush1.msra.mxu0 %v92
    %102 = vmatprep.subr.mxu0 0.0
    %103 = vmatpush1.msra.mxu0 0.0
    %104 = vmatprep.subr.mxu0 0.0
    %105 = vmatpush1.msra.mxu0 0.0
    %106 = vmatprep.subr.mxu0 0.0
    %107 = vmatpush1.msra.mxu0 0.0
    %108 = vmatprep.subr.mxu0 0.0
    %109 = vmatpush1.msra.mxu0 0.0
    %110 = vmatprep.subr.mxu0 0.0
    %111 = vmatpush1.msra.mxu0 0.0
    %112 = vmatprep.subr.mxu0 0.0
    %113 = vmatpush1.msra.mxu0 0.0
    %114 = vmatprep.subr.mxu0 0.0
    %115 = vmatpush1.msra.mxu0 0.0
    %116 = vmatprep.subr.mxu0 0.0
    %117 = vmatpush1.msra.mxu0 0.0
    %118 = vmatprep.subr.mxu0 0.0
    %119 = vmatpush1.msra.mxu0 0.0
    %120 = vmatprep.subr.mxu0 0.0
    %121 = vmatpush1.msra.mxu0 0.0
    %122 = vmatprep.subr.mxu0 0.0
    %123 = vmatpush1.msra.mxu0 0.0
    %124 = vmatprep.subr.mxu0 0.0
    %125 = vmatpush1.msra.mxu0 0.0
    %126 = vmatprep.subr.mxu0 0.0
    %127 = vmatpush1.msra.mxu0 0.0
    %128 = vmatprep.subr.mxu0 0.0
    %129 = vmatpush1.msra.mxu0 0.0
    %130 = vmatprep.subr.mxu0 0.0
    %131 = vmatpush1.msra.mxu0 0.0
    %132 = vmatprep.subr.mxu0 0.0
    %133 = vmatpush1.msra.mxu0 0.0
    %134 = vmatprep.subr.mxu0 0.0
    %135 = vmatpush1.msra.mxu0 0.0
    %136 = vmatprep.subr.mxu0 0.0
    %137 = vmatpush1.msra.mxu0 0.0
    %138 = vmatprep.subr.mxu0 0.0
    %139 = vmatpush1.msra.mxu0 0.0
    %140 = vmatprep.subr.mxu0 0.0
    %141 = vmatpush1.msra.mxu0 0.0
    %142 = vmatprep.subr.mxu0 0.0
    %143 = vmatpush1.msra.mxu0 0.0
    %144 = vmatprep.subr.mxu0 0.0
    %145 = vmatpush1.msra.mxu0 0.0
    %146 = vmatprep.subr.mxu0 0.0
    %147 = vmatpush1.msra.mxu0 0.0
    %148 = vmatprep.subr.mxu0 0.0
    %149 = vmatpush1.msra.mxu0 0.0
    %150 = vmatprep.subr.mxu0 0.0
    %151 = vmatpush1.msra.mxu0 0.0
    %152 = vmatprep.subr.mxu0 0.0
    %153 = vmatpush1.msra.mxu0 0.0
    %154 = vmatprep.subr.mxu0 0.0
    %155 = vmatpush1.msra.mxu0 0.0
    %156 = vmatprep.subr.mxu0 0.0
    %157 = vmatpush1.msra.mxu0 0.0
    %158 = vmatprep.subr.mxu0 0.0
    %159 = vmatpush1.msra.mxu0 0.0
    %160 = vmatprep.subr.mxu0 0.0
    %161 = vmatpush1.msra.mxu0 0.0
    %162 = vmatprep.mubr.f32.mxu0 0.0
    %163 = vmatmul.mubr.f32.gmra.mrb[0].mxu0 %v96
    %v164 = vpop.f32.mrb[0].mxu0
    %v165 = vadd.f32 %v93, %v164
    %v166 = vpop.f32.mrb[0].mxu0
    %167 = vdwg.mxu0
    %v168 = vmax.f32 %v165, 0.0
    %v169 = vld [vmem:[#allocation7] sm:$0xff]
    %v170 = vld [vmem:[#allocation7 + $0x8] sm:$0xff]
    %v171 = vld [vmem:[#allocation7 + $0x10] sm:$0xff]
    %v172 = vld [vmem:[#allocation7 + $0x18] sm:$0xff]
    %v173 = vld [vmem:[#allocation7 + $0x20] sm:$0xff]
    %v174 = vld [vmem:[#allocation7 + $0x28] sm:$0xff]
    %v175 = vld [vmem:[#allocation7 + $0x30] sm:$0xff]
    %v176 = vld [vmem:[#allocation7 + $0x38] sm:$0xff]
    %v177 = vld [vmem:[#allocation7 + $0x40] sm:$0xff]
    %v178 = vld [vmem:[#allocation7 + $0x48] sm:$0xff]
    %v179 = vld [vmem:[#allocation7 + $0x50] sm:$0xff]
    %v180 = vld [vmem:[#allocation7 + $0x58] sm:$0xff]
    %v181 = vld [vmem:[#allocation7 + $0x60] sm:$0xff]
    %v182 = vld [vmem:[#allocation7 + $0x68] sm:$0xff]
    %v183 = vld [vmem:[#allocation7 + $0x70] sm:$0xff]
    %v184 = vld [vmem:[#allocation7 + $0x78] sm:$0xff]
    %v185 = vld [vmem:[%s5 + $0x1] ss:$0 sm:$0xff]
    %186 = vmatprep.subr.mxu0 0.0
    %187 = vmatpush1.msra.mxu0 %v169
    %188 = vmatprep.subr.mxu0 0.0
    %189 = vmatpush1.msra.mxu0 %v170
    %190 = vmatprep.subr.mxu0 0.0
    %191 = vmatpush1.msra.mxu0 %v171
    %192 = vmatprep.subr.mxu0 0.0
    %193 = vmatpush1.msra.mxu0 %v172
    %194 = vmatprep.subr.mxu0 0.0
    %195 = vmatpush1.msra.mxu0 %v173
    %196 = vmatprep.subr.mxu0 0.0
    %197 = vmatpush1.msra.mxu0 %v174
    %198 = vmatprep.subr.mxu0 0.0
    %199 = vmatpush1.msra.mxu0 %v175
    %200 = vmatprep.subr.mxu0 0.0
    %201 = vmatpush1.msra.mxu0 %v176
    %202 = vmatprep.subr.mxu0 0.0
    %203 = vmatpush1.msra.mxu0 %v177
    %204 = vmatprep.subr.mxu0 0.0
    %205 = vmatpush1.msra.mxu0 %v178
    %206 = vmatprep.subr.mxu0 0.0
    %207 = vmatpush1.msra.mxu0 %v179
    %208 = vmatprep.subr.mxu0 0.0
    %209 = vmatpush1.msra.mxu0 %v180
    %210 = vmatprep.subr.mxu0 0.0
    %211 = vmatpush1.msra.mxu0 %v181
    %212 = vmatprep.subr.mxu0 0.0
    %213 = vmatpush1.msra.mxu0 %v182
    %214 = vmatprep.subr.mxu0 0.0
    %215 = vmatpush1.msra.mxu0 %v183
    %216 = vmatprep.subr.mxu0 0.0
    %217 = vmatpush1.msra.mxu0 %v184
    %218 = vmatprep.subr.mxu0 0.0
    %219 = vmatpush1.msra.mxu0 0.0
    %220 = vmatprep.subr.mxu0 0.0
    %221 = vmatpush1.msra.mxu0 0.0
    %222 = vmatprep.subr.mxu0 0.0
    %223 = vmatpush1.msra.mxu0 0.0
    %224 = vmatprep.subr.mxu0 0.0
    %225 = vmatpush1.msra.mxu0 0.0
    %226 = vmatprep.subr.mxu0 0.0
    %227 = vmatpush1.msra.mxu0 0.0
    %228 = vmatprep.subr.mxu0 0.0
    %229 = vmatpush1.msra.mxu0 0.0
    %230 = vmatprep.subr.mxu0 0.0
    %231 = vmatpush1.msra.mxu0 0.0
    %232 = vmatprep.subr.mxu0 0.0
    %233 = vmatpush1.msra.mxu0 0.0
    %234 = vmatprep.subr.mxu0 0.0
    %235 = vmatpush1.msra.mxu0 0.0
    %236 = vmatprep.subr.mxu0 0.0
    %237 = vmatpush1.msra.mxu0 0.0
    %238 = vmatprep.subr.mxu0 0.0
    %239 = vmatpush1.msra.mxu0 0.0
    %240 = vmatprep.subr.mxu0 0.0
    %241 = vmatpush1.msra.mxu0 0.0
    %242 = vmatprep.subr.mxu0 0.0
    %243 = vmatpush1.msra.mxu0 0.0
    %244 = vmatprep.subr.mxu0 0.0
    %245 = vmatpush1.msra.mxu0 0.0
    %246 = vmatprep.subr.mxu0 0.0
    %247 = vmatpush1.msra.mxu0 0.0
    %248 = vmatprep.subr.mxu0 0.0
    %249 = vmatpush1.msra.mxu0 0.0
    %250 = vmatprep.mubr.f32.mxu0 0.0
    %251 = vmatmul.mubr.f32.gmra.mrb[0].mxu0 %v168
    %v252 = vpop.f32.mrb[0].mxu0
    %v253 = vadd.f32 %v185, %v252
    %v254 = vpop.f32.mrb[0].mxu0
    %255 = vdwg.mxu0
    %v256 = vmax.f32 %v253, 0.0
    %v257 = vld [vmem:[#allocation8] sm:$0xff]
    %v258 = vld [vmem:[#allocation8 + $0x8] sm:$0xff]
    %v259 = vld [vmem:[#allocation8 + $0x10] sm:$0xff]
    %v260 = vld [vmem:[#allocation8 + $0x18] sm:$0xff]
    %v261 = vld [vmem:[#allocation8 + $0x20] sm:$0xff]
    %v262 = vld [vmem:[#allocation8 + $0x28] sm:$0xff]
    %v263 = vld [vmem:[#allocation8 + $0x30] sm:$0xff]
    %v264 = vld [vmem:[#allocation8 + $0x38] sm:$0xff]
    %v265 = vld [vmem:[#allocation8 + $0x40] sm:$0xff]
    %v266 = vld [vmem:[#allocation8 + $0x48] sm:$0xff]
    %v267 = vld [vmem:[#allocation8 + $0x50] sm:$0xff]
    %v268 = vld [vmem:[#allocation8 + $0x58] sm:$0xff]
    %v269 = vld [vmem:[#allocation8 + $0x60] sm:$0xff]
    %v270 = vld [vmem:[#allocation8 + $0x68] sm:$0xff]
    %v271 = vld [vmem:[#allocation8 + $0x70] sm:$0xff]
    %v272 = vld [vmem:[#allocation8 + $0x78] sm:$0xff]
    %v273 = vld [vmem:[#allocation8 + $0x80] sm:$0xff]
    %v274 = vld [vmem:[#allocation8 + $0x88] sm:$0xff]
    %v275 = vld [vmem:[#allocation8 + $0x90] sm:$0xff]
    %v276 = vld [vmem:[#allocation8 + $0x98] sm:$0xff]
    %v277 = vld [vmem:[#allocation8 + $0xa0] sm:$0xff]
    %v278 = vld [vmem:[#allocation8 + $0xa8] sm:$0xff]
    %v279 = vld [vmem:[#allocation8 + $0xb0] sm:$0xff]
    %v280 = vld [vmem:[#allocation8 + $0xb8] sm:$0xff]
    %v281 = vld [vmem:[#allocation8 + $0xc0] sm:$0xff]
    %v282 = vld [vmem:[#allocation8 + $0xc8] sm:$0xff]
    %v283 = vld [vmem:[#allocation8 + $0xd0] sm:$0xff]
    %v284 = vld [vmem:[#allocation8 + $0xd8] sm:$0xff]
    %v285 = vld [vmem:[#allocation8 + $0xe0] sm:$0xff]
    %v286 = vld [vmem:[#allocation8 + $0xe8] sm:$0xff]
    %v287 = vld [vmem:[#allocation8 + $0xf0] sm:$0xff]
    %v288 = vld [vmem:[#allocation8 + $0xf8] sm:$0xff]
    %s289 = scalar_lea.vmem %s5, 2
    %v290 = vld [vmem:[%s289] ss:$8 sm:$0x3]
    %v292 = vlaneseq
    %v293 = vshrl.u32 %v292, 7
    %v294 = vsub.s32 0, %v293
    %v295 = vrot.slane %v290, %v294
    %v296 = vlaneseq
    %v297 = vshrl.u32 %v296, 7
    %v298 = vsub.s32 1, %v297
    %v299 = vrot.slane %v290, %v298
    %302 = vmatprep.subr.mxu0 %v258
    %303 = vmatpush1.msra.mxu0 %v257
    %304 = vmatprep.subr.mxu0 %v260
    %305 = vmatpush1.msra.mxu0 %v259
    %306 = vmatprep.subr.mxu0 %v262
    %307 = vmatpush1.msra.mxu0 %v261
    %308 = vmatprep.subr.mxu0 %v264
    %309 = vmatpush1.msra.mxu0 %v263
    %310 = vmatprep.subr.mxu0 %v266
    %311 = vmatpush1.msra.mxu0 %v265
    %312 = vmatprep.subr.mxu0 %v268
    %313 = vmatpush1.msra.mxu0 %v267
    %314 = vmatprep.subr.mxu0 %v270
    %315 = vmatpush1.msra.mxu0 %v269
    %316 = vmatprep.subr.mxu0 %v272
    %317 = vmatpush1.msra.mxu0 %v271
    %318 = vmatprep.subr.mxu0 %v274
    %319 = vmatpush1.msra.mxu0 %v273
    %320 = vmatprep.subr.mxu0 %v276
    %321 = vmatpush1.msra.mxu0 %v275
    %322 = vmatprep.subr.mxu0 %v278
    %323 = vmatpush1.msra.mxu0 %v277
    %324 = vmatprep.subr.mxu0 %v280
    %325 = vmatpush1.msra.mxu0 %v279
    %326 = vmatprep.subr.mxu0 %v282
    %327 = vmatpush1.msra.mxu0 %v281
    %328 = vmatprep.subr.mxu0 %v284
    %329 = vmatpush1.msra.mxu0 %v283
    %330 = vmatprep.subr.mxu0 %v286
    %331 = vmatpush1.msra.mxu0 %v285
    %332 = vmatprep.subr.mxu0 %v288
    %333 = vmatpush1.msra.mxu0 %v287
    %334 = vmatprep.subr.mxu0 0.0
    %335 = vmatpush1.msra.mxu0 0.0
    %336 = vmatprep.subr.mxu0 0.0
    %337 = vmatpush1.msra.mxu0 0.0
    %338 = vmatprep.subr.mxu0 0.0
    %339 = vmatpush1.msra.mxu0 0.0
    %340 = vmatprep.subr.mxu0 0.0
    %341 = vmatpush1.msra.mxu0 0.0
    %342 = vmatprep.subr.mxu0 0.0
    %343 = vmatpush1.msra.mxu0 0.0
    %344 = vmatprep.subr.mxu0 0.0
    %345 = vmatpush1.msra.mxu0 0.0
    %346 = vmatprep.subr.mxu0 0.0
    %347 = vmatpush1.msra.mxu0 0.0
    %348 = vmatprep.subr.mxu0 0.0
    %349 = vmatpush1.msra.mxu0 0.0
    %350 = vmatprep.subr.mxu0 0.0
    %351 = vmatpush1.msra.mxu0 0.0
    %352 = vmatprep.subr.mxu0 0.0
    %353 = vmatpush1.msra.mxu0 0.0
    %354 = vmatprep.subr.mxu0 0.0
    %355 = vmatpush1.msra.mxu0 0.0
    %356 = vmatprep.subr.mxu0 0.0
    %357 = vmatpush1.msra.mxu0 0.0
    %358 = vmatprep.subr.mxu0 0.0
    %359 = vmatpush1.msra.mxu0 0.0
    %360 = vmatprep.subr.mxu0 0.0
    %361 = vmatpush1.msra.mxu0 0.0
    %362 = vmatprep.subr.mxu0 0.0
    %363 = vmatpush1.msra.mxu0 0.0
    %364 = vmatprep.subr.mxu0 0.0
    %365 = vmatpush1.msra.mxu0 0.0
    %366 = vmatprep.mubr.f32.mxu0 0.0
    %367 = vmatmul.mubr.f32.gmra.mrb[0].mxu0 %v256
    %v368 = vpop.f32.mrb[0].mxu0
    %v369 = vadd.f32 %v295, %v368
    %v370 = vpop.f32.mrb[0].mxu0
    %v371 = vadd.f32 %v299, %v370
    %372 = vdwg.mxu0
    %v373 = vmax.f32 %v369, 0.0
    %v374 = vmax.f32 %v371, 0.0
    %v375 = vld [vmem:[#allocation10] sm:$0xff]
    %v376 = vld [vmem:[#allocation10 + $0x8] sm:$0xff]
    %v377 = vld [vmem:[#allocation10 + $0x10] sm:$0xff]
    %v378 = vld [vmem:[#allocation10 + $0x18] sm:$0xff]
    %v379 = vld [vmem:[#allocation10 + $0x20] sm:$0xff]
    %v380 = vld [vmem:[#allocation10 + $0x28] sm:$0xff]
    %v381 = vld [vmem:[#allocation10 + $0x30] sm:$0xff]
    %v382 = vld [vmem:[#allocation10 + $0x38] sm:$0xff]
    %v383 = vld [vmem:[#allocation10 + $0x40] sm:$0xff]
    %v384 = vld [vmem:[#allocation10 + $0x48] sm:$0xff]
    %v385 = vld [vmem:[#allocation10 + $0x50] sm:$0xff]
    %v386 = vld [vmem:[#allocation10 + $0x58] sm:$0xff]
    %v387 = vld [vmem:[#allocation10 + $0x60] sm:$0xff]
    %v388 = vld [vmem:[#allocation10 + $0x68] sm:$0xff]
    %v389 = vld [vmem:[#allocation10 + $0x70] sm:$0xff]
    %v390 = vld [vmem:[#allocation10 + $0x78] sm:$0xff]
    %v391 = vld [vmem:[#allocation10 + $0x80] sm:$0xff]
    %v392 = vld [vmem:[#allocation10 + $0x88] sm:$0xff]
    %v393 = vld [vmem:[#allocation10 + $0x90] sm:$0xff]
    %v394 = vld [vmem:[#allocation10 + $0x98] sm:$0xff]
    %v395 = vld [vmem:[#allocation10 + $0xa0] sm:$0xff]
    %v396 = vld [vmem:[#allocation10 + $0xa8] sm:$0xff]
    %v397 = vld [vmem:[#allocation10 + $0xb0] sm:$0xff]
    %v398 = vld [vmem:[#allocation10 + $0xb8] sm:$0xff]
    %v399 = vld [vmem:[#allocation10 + $0xc0] sm:$0xff]
    %v400 = vld [vmem:[#allocation10 + $0xc8] sm:$0xff]
    %v401 = vld [vmem:[#allocation10 + $0xd0] sm:$0xff]
    %v402 = vld [vmem:[#allocation10 + $0xd8] sm:$0xff]
    %v403 = vld [vmem:[#allocation10 + $0xe0] sm:$0xff]
    %v404 = vld [vmem:[#allocation10 + $0xe8] sm:$0xff]
    %v405 = vld [vmem:[#allocation10 + $0xf0] sm:$0xff]
    %v406 = vld [vmem:[#allocation10 + $0xf8] sm:$0xff]
    %v407 = vld [vmem:[%s5 + $0x3] ss:$0 sm:$0xff]
    %408 = vmatprep.subr.mxu0 0.0
    %409 = vmatpush1.msra.mxu0 %v375
    %410 = vmatprep.subr.mxu0 0.0
    %411 = vmatpush1.msra.mxu0 %v376
    %412 = vmatprep.subr.mxu0 0.0
    %413 = vmatpush1.msra.mxu0 %v377
    %414 = vmatprep.subr.mxu0 0.0
    %415 = vmatpush1.msra.mxu0 %v378
    %416 = vmatprep.subr.mxu0 0.0
    %417 = vmatpush1.msra.mxu0 %v379
    %418 = vmatprep.subr.mxu0 0.0
    %419 = vmatpush1.msra.mxu0 %v380
    %420 = vmatprep.subr.mxu0 0.0
    %421 = vmatpush1.msra.mxu0 %v381
    %422 = vmatprep.subr.mxu0 0.0
    %423 = vmatpush1.msra.mxu0 %v382
    %424 = vmatprep.subr.mxu0 0.0
    %425 = vmatpush1.msra.mxu0 %v383
    %426 = vmatprep.subr.mxu0 0.0
    %427 = vmatpush1.msra.mxu0 %v384
    %428 = vmatprep.subr.mxu0 0.0
    %429 = vmatpush1.msra.mxu0 %v385
    %430 = vmatprep.subr.mxu0 0.0
    %431 = vmatpush1.msra.mxu0 %v386
    %432 = vmatprep.subr.mxu0 0.0
    %433 = vmatpush1.msra.mxu0 %v387
    %434 = vmatprep.subr.mxu0 0.0
    %435 = vmatpush1.msra.mxu0 %v388
    %436 = vmatprep.subr.mxu0 0.0
    %437 = vmatpush1.msra.mxu0 %v389
    %438 = vmatprep.subr.mxu0 0.0
    %439 = vmatpush1.msra.mxu0 %v390
    %440 = vmatprep.subr.mxu0 0.0
    %441 = vmatpush1.msra.mxu0 %v391
    %442 = vmatprep.subr.mxu0 0.0
    %443 = vmatpush1.msra.mxu0 %v392
    %444 = vmatprep.subr.mxu0 0.0
    %445 = vmatpush1.msra.mxu0 %v393
    %446 = vmatprep.subr.mxu0 0.0
    %447 = vmatpush1.msra.mxu0 %v394
    %448 = vmatprep.subr.mxu0 0.0
    %449 = vmatpush1.msra.mxu0 %v395
    %450 = vmatprep.subr.mxu0 0.0
    %451 = vmatpush1.msra.mxu0 %v396
    %452 = vmatprep.subr.mxu0 0.0
    %453 = vmatpush1.msra.mxu0 %v397
    %454 = vmatprep.subr.mxu0 0.0
    %455 = vmatpush1.msra.mxu0 %v398
    %456 = vmatprep.subr.mxu0 0.0
    %457 = vmatpush1.msra.mxu0 %v399
    %458 = vmatprep.subr.mxu0 0.0
    %459 = vmatpush1.msra.mxu0 %v400
    %460 = vmatprep.subr.mxu0 0.0
    %461 = vmatpush1.msra.mxu0 %v401
    %462 = vmatprep.subr.mxu0 0.0
    %463 = vmatpush1.msra.mxu0 %v402
    %464 = vmatprep.subr.mxu0 0.0
    %465 = vmatpush1.msra.mxu0 %v403
    %466 = vmatprep.subr.mxu0 0.0
    %467 = vmatpush1.msra.mxu0 %v404
    %468 = vmatprep.subr.mxu0 0.0
    %469 = vmatpush1.msra.mxu0 %v405
    %470 = vmatprep.subr.mxu0 0.0
    %471 = vmatpush1.msra.mxu0 %v406
    %472 = vmatprep.mubr.f32.mxu0 %v374
    %473 = vmatmul.mubr.f32.gmra.mrb[0].mxu0 %v373
    %v474 = vpop.f32.mrb[0].mxu0
    %v475 = vadd.f32 %v407, %v474
    %v476 = vpop.f32.mrb[0].mxu0
    %477 = vdwg.mxu0
    %478 = vxpose.xlu0.b32.start [1/16] %v475, 128
    %479 = vxpose.xlu0.b32.cont [2/16] 0.0, 128
    %480 = vxpose.xlu0.b32.cont [3/16] 0.0, 128
    %481 = vxpose.xlu0.b32.cont [4/16] 0.0, 128
    %482 = vxpose.xlu0.b32.cont [5/16] 0.0, 128
    %483 = vxpose.xlu0.b32.cont [6/16] 0.0, 128
    %484 = vxpose.xlu0.b32.cont [7/16] 0.0, 128
    %485 = vxpose.xlu0.b32.cont [8/16] 0.0, 128
    %486 = vxpose.xlu0.b32.cont [9/16] 0.0, 128
    %487 = vxpose.xlu0.b32.cont [10/16] 0.0, 128
    %488 = vxpose.xlu0.b32.cont [11/16] 0.0, 128
    %489 = vxpose.xlu0.b32.cont [12/16] 0.0, 128
    %490 = vxpose.xlu0.b32.cont [13/16] 0.0, 128
    %491 = vxpose.xlu0.b32.cont [14/16] 0.0, 128
    %492 = vxpose.xlu0.b32.cont [15/16] 0.0, 128
    %493 = vxpose.xlu0.b32.end [16/16] 0.0, 128
    %v494 = vpop.trf.xlu0
    %v495 = vpop.trf.xlu0
    %v496 = vpop.trf.xlu0
    %v497 = vpop.trf.xlu0
    %v498 = vpop.trf.xlu0
    %v499 = vpop.trf.xlu0
    %v500 = vpop.trf.xlu0
    %v501 = vpop.trf.xlu0
    %v502 = vpop.trf.xlu0
    %v503 = vpop.trf.xlu0
    %v504 = vpop.trf.xlu0
    %v505 = vpop.trf.xlu0
    %v506 = vpop.trf.xlu0
    %v507 = vpop.trf.xlu0
    %v508 = vpop.trf.xlu0
    %v509 = vpop.trf.xlu0
    %vm510 = vcmask 64512
    %511 = vst.msk [vmem:[#allocation11] sm:$0xff] %vm510, %v494
    // Predicated region
    $region46: #{tpu_custom_call.1} parent=1 // pred_check
      _
    $region47: #{tpu_custom_call.1} parent=1 // pred_check_branch
      %513 = sbr.rel (0) target = $region49
    $region48: #{tpu_custom_call.1} parent=1 // pred_region
      %s515 = ssub.s32 128, 128
      %516 = vsyncadd [#allocation4], %s515
      %s518 = sshll.u32 [#allocation11], 4
      %s519 = int_to_ptr.vmem [resolvable:$true] %s518
      %521 = dma.vmem_to_hbm [thread:$0]  %s519, 128, %s6, [#allocation4]
    $region49: #{tpu_custom_call.1} parent=1 // pred_fallthru
      _
    // Predicated region
    $region50: #{tpu_custom_call.1} parent=1 // pred_check
      _
    $region51: #{tpu_custom_call.1} parent=1 // pred_check_branch
      %523 = sbr.rel (0) target = $region53
    $region52: #{tpu_custom_call.1} parent=1 // pred_region
      %524 = dma.done [#allocation4], 128
    $region53: #{tpu_custom_call.1} parent=1 // pred_fallthru
      _
    %525 = vsyncpa [#allocation3], 1
    %526 = vsyncpa [#allocation6], 1
    %527 = vsyncpa [#allocation9], 1
    %528 = vsyncpa [#allocation4], 1

// kernel: tpu_custom_call.1
$region0: #{tpu_custom_call.1}
  #allocation0 [shape = 'u32[]', space=smem, size = 0x4, offset = 0x4, fixed_abs, tag = 'smem constant byte address 0x4 - core index']
  #allocation1 [shape = 'u32[144,128]{1,0:T(1,128)}', space=vmem, size = 0x12000, scoped, tag = 'internal scratch']
  %s0 = inlined_call_operand.hbm [shape: f32[8,16], index: 0, kind: input, shape index: {}]
  %s1 = inlined_call_operand.hbm [shape: f32[16,128], index: 1, kind: input, shape index: {}]
  %s2 = inlined_call_operand.hbm [shape: f32[128,128], index: 2, kind: input, shape index: {}]
  %s3 = inlined_call_operand.hbm [shape: f32[128,256], index: 3, kind: input, shape index: {}]
  %s4 = inlined_call_operand.hbm [shape: f32[256,128], index: 4, kind: input, shape index: {}]
  %s5 = inlined_call_operand.vmem [shape: f32[8,256], index: 5, kind: input, shape index: {}]
  %s6 = inlined_call_operand.hbm [shape: f32[8,8], index: 6, kind: output, shape index: {}]
  %s7 = sld [smem:[#allocation0]]
  $region54: #{tpu_custom_call.1} parent=0
    _
  %s9 = ssub.s32 1, %s7
  %s10 = scalar_select 0, %s9, %s7
  $region1: #{tpu_custom_call.1} parent=0
    #allocation2 [shape = 'u8[4096]{0}', space=vmem, size = 0x1000, scoped, tag = 'input window, operand 0, single buffered']
    #allocation3 [shape = 's32[1]{0}', space=sflag, size = 0x4, scoped, tag = 'scoped memory for tpu_custom_call.1']
    #allocation4 [shape = 's32[1]{0}', space=sflag, size = 0x4, scoped, tag = 'scoped memory for tpu_custom_call.1']
    #allocation5 [shape = 'u8[8192]{0}', space=vmem, size = 0x2000, scoped, tag = 'input window, operand 1, single buffered']
    #allocation6 [shape = 's32[1]{0}', space=sflag, size = 0x4, scoped, tag = 'scoped memory for tpu_custom_call.1']
    #allocation7 [shape = 'u8[65536]{0}', space=vmem, size = 0x10000, scoped, tag = 'input window, operand 2, single buffered']
    #allocation8 [shape = 'u8[131072]{0}', space=vmem, size = 0x20000, scoped, tag = 'input window, operand 3, single buffered']
    #allocation9 [shape = 's32[1]{0}', space=sflag, size = 0x4, scoped, tag = 'scoped memory for tpu_custom_call.1']
    #allocation10 [shape = 'u8[131072]{0}', space=vmem, size = 0x20000, scoped, tag = 'input window, operand 4, single buffered']
    #allocation11 [shape = 'u8[4096]{0}', space=vmem, size = 0x1000, scoped, tag = 'output window, operand 0, single buffered']
    %11 = vsyncpa [#allocation3], 0
    %12 = vsyncpa [#allocation6], 0
    %13 = vsyncpa [#allocation9], 0
    %14 = vsyncpa [#allocation4], 0
    // Predicated region
    $region2: #{tpu_custom_call.1} parent=1 // pred_check
      _
    $region3: #{tpu_custom_call.1} parent=1 // pred_check_branch
      %16 = sbr.rel (0) target = $region5
    $region4: #{tpu_custom_call.1} parent=1 // pred_region
      %s18 = ssub.s32 128, 128
      %19 = vsyncadd [#allocation3], %s18
      %s21 = sshll.u32 [#allocation2], 4
      %s22 = int_to_ptr.vmem [resolvable:$true] %s21
      %24 = dma.hbm_to_vmem [thread:$0]  %s0, 128, %s22, [#allocation3]
    $region5: #{tpu_custom_call.1} parent=1 // pred_fallthru
      _
    // Predicated region
    $region6: #{tpu_custom_call.1} parent=1 // pred_check
      _
    $region7: #{tpu_custom_call.1} parent=1 // pred_check_branch
      %26 = sbr.rel (0) target = $region9
    $region8: #{tpu_custom_call.1} parent=1 // pred_region
      %s28 = ssub.s32 256, 256
      %29 = vsyncadd [#allocation6], %s28
      %s30 = sshll.u32 [#allocation5], 4
      %s31 = int_to_ptr.vmem [resolvable:$true] %s30
      %36 = dma.hbm_to_vmem [thread:$0]  %s1, 256, %s31, [#allocation6], 128, 128, 8
    $region9: #{tpu_custom_call.1} parent=1 // pred_fallthru
      _
    // Predicated region
    $region10: #{tpu_custom_call.1} parent=1 // pred_check
      _
    $region11: #{tpu_custom_call.1} parent=1 // pred_check_branch
      %38 = sbr.rel (0) target = $region13
    $region12: #{tpu_custom_call.1} parent=1 // pred_region
      %s40 = ssub.s32 2048, 2048
      %41 = vsyncadd [#allocation6], %s40
      %s42 = sshll.u32 [#allocation7], 4
      %s43 = int_to_ptr.vmem [resolvable:$true] %s42
      %48 = dma.hbm_to_vmem [thread:$0]  %s2, 2048, %s43, [#allocation6], 128, 128, 8
    $region13: #{tpu_custom_call.1} parent=1 // pred_fallthru
      _
    // Predicated region
    $region14: #{tpu_custom_call.1} parent=1 // pred_check
      _
    $region15: #{tpu_custom_call.1} parent=1 // pred_check_branch
      %50 = sbr.rel (0) target = $region17
    $region16: #{tpu_custom_call.1} parent=1 // pred_region
      %s52 = ssub.s32 4096, 4096
      %53 = vsyncadd [#allocation9], %s52
      %s54 = sshll.u32 [#allocation8], 4
      %s55 = int_to_ptr.vmem [resolvable:$true] %s54
      %60 = dma.hbm_to_vmem [thread:$0]  %s3, 4096, %s55, [#allocation9], 256, 256, 16
    $region17: #{tpu_custom_call.1} parent=1 // pred_fallthru
      _
    // Predicated region
    $region18: #{tpu_custom_call.1} parent=1 // pred_check
      _
    $region19: #{tpu_custom_call.1} parent=1 // pred_check_branch
      %62 = sbr.rel (0) target = $region21
    $region20: #{tpu_custom_call.1} parent=1 // pred_region
      %s64 = ssub.s32 4096, 4096
      %65 = vsyncadd [#allocation9], %s64
      %s66 = sshll.u32 [#allocation10], 4
      %s67 = int_to_ptr.vmem [resolvable:$true] %s66
      %72 = dma.hbm_to_vmem [thread:$0]  %s4, 4096, %s67, [#allocation9], 128, 128, 8
    $region21: #{tpu_custom_call.1} parent=1 // pred_fallthru
      _
    // Predicated region
    $region22: #{tpu_custom_call.1} parent=1 // pred_check
      _
    $region23: #{tpu_custom_call.1} parent=1 // pred_check_branch
      %74 = sbr.rel (0) target = $region25
    $region24: #{tpu_custom_call.1} parent=1 // pred_region
      _
    $region25: #{tpu_custom_call.1} parent=1 // pred_fallthru
      _
    // Predicated region
    $region26: #{tpu_custom_call.1} parent=1 // pred_check
      _
    $region27: #{tpu_custom_call.1} parent=1 // pred_check_branch
      %76 = sbr.rel (0) target = $region29
    $region28: #{tpu_custom_call.1} parent=1 // pred_region
      %77 = dma.done [#allocation3], 128
    $region29: #{tpu_custom_call.1} parent=1 // pred_fallthru
      _
    // Predicated region
    $region30: #{tpu_custom_call.1} parent=1 // pred_check
      _
    $region31: #{tpu_custom_call.1} parent=1 // pred_check_branch
      %79 = sbr.rel (0) target = $region33
    $region32: #{tpu_custom_call.1} parent=1 // pred_region
      %80 = dma.done [#allocation6], 256
    $region33: #{tpu_custom_call.1} parent=1 // pred_fallthru
      _
    // Predicated region
    $region34: #{tpu_custom_call.1} parent=1 // pred_check
      _
    $region35: #{tpu_custom_call.1} parent=1 // pred_check_branch
      %82 = sbr.rel (0) target = $region37
    $region36: #{tpu_custom_call.1} parent=1 // pred_region
      %83 = dma.done [#allocation6], 2048
    $region37: #{tpu_custom_call.1} parent=1 // pred_fallthru
      _
    // Predicated region
    $region38: #{tpu_custom_call.1} parent=1 // pred_check
      _
    $region39: #{tpu_custom_call.1} parent=1 // pred_check_branch
      %85 = sbr.rel (0) target = $region41
    $region40: #{tpu_custom_call.1} parent=1 // pred_region
      %86 = dma.done [#allocation9], 4096
    $region41: #{tpu_custom_call.1} parent=1 // pred_fallthru
      _
    // Predicated region
    $region42: #{tpu_custom_call.1} parent=1 // pred_check
      _
    $region43: #{tpu_custom_call.1} parent=1 // pred_check_branch
      %88 = sbr.rel (0) target = $region45
    $region44: #{tpu_custom_call.1} parent=1 // pred_region
      %89 = dma.done [#allocation9], 4096
    $region45: #{tpu_custom_call.1} parent=1 // pred_fallthru
      _
    %v90 = vld [vmem:[#allocation2] sm:$0xff]
    %v91 = vld [vmem:[#allocation5] sm:$0xff]
    %v92 = vld [vmem:[#allocation5 + $0x8] sm:$0xff]
    %v93 = vld [vmem:[%s5] ss:$0 sm:$0xff]
    %vm94 = vcmask 130048
    %v96 = vsel %vm94, %v90, 0
    %98 = vmatprep.subr.mxu0 0.0
    %99 = vmatpush1.msra.mxu0 %v91
    %100 = vmatprep.subr.mxu0 0.0
    %101 = vmatpush1.msra.mxu0 %v92
    %102 = vmatprep.subr.mxu0 0.0
    %103 = vmatpush1.msra.mxu0 0.0
    %104 = vmatprep.subr.mxu0 0.0
    %105 = vmatpush1.msra.mxu0 0.0
    %106 = vmatprep.subr.mxu0 0.0
    %107 = vmatpush1.msra.mxu0 0.0
    %108 = vmatprep.subr.mxu0 0.0
    %109 = vmatpush1.msra.mxu0 0.0
    %110 = vmatprep.subr.mxu0 0.0
    %111 = vmatpush1.msra.mxu0 0.0
    %112 = vmatprep.subr.mxu0 0.0
    %113 = vmatpush1.msra.mxu0 0.0
    %114 = vmatprep.subr.mxu0 0.0
    %115 = vmatpush1.msra.mxu0 0.0
    %116 = vmatprep.subr.mxu0 0.0
    %117 = vmatpush1.msra.mxu0 0.0
    %118 = vmatprep.subr.mxu0 0.0
    %119 = vmatpush1.msra.mxu0 0.0
    %120 = vmatprep.subr.mxu0 0.0
    %121 = vmatpush1.msra.mxu0 0.0
    %122 = vmatprep.subr.mxu0 0.0
    %123 = vmatpush1.msra.mxu0 0.0
    %124 = vmatprep.subr.mxu0 0.0
    %125 = vmatpush1.msra.mxu0 0.0
    %126 = vmatprep.subr.mxu0 0.0
    %127 = vmatpush1.msra.mxu0 0.0
    %128 = vmatprep.subr.mxu0 0.0
    %129 = vmatpush1.msra.mxu0 0.0
    %130 = vmatprep.subr.mxu0 0.0
    %131 = vmatpush1.msra.mxu0 0.0
    %132 = vmatprep.subr.mxu0 0.0
    %133 = vmatpush1.msra.mxu0 0.0
    %134 = vmatprep.subr.mxu0 0.0
    %135 = vmatpush1.msra.mxu0 0.0
    %136 = vmatprep.subr.mxu0 0.0
    %137 = vmatpush1.msra.mxu0 0.0
    %138 = vmatprep.subr.mxu0 0.0
    %139 = vmatpush1.msra.mxu0 0.0
    %140 = vmatprep.subr.mxu0 0.0
    %141 = vmatpush1.msra.mxu0 0.0
    %142 = vmatprep.subr.mxu0 0.0
    %143 = vmatpush1.msra.mxu0 0.0
    %144 = vmatprep.subr.mxu0 0.0
    %145 = vmatpush1.msra.mxu0 0.0
    %146 = vmatprep.subr.mxu0 0.0
    %147 = vmatpush1.msra.mxu0 0.0
    %148 = vmatprep.subr.mxu0 0.0
    %149 = vmatpush1.msra.mxu0 0.0
    %150 = vmatprep.subr.mxu0 0.0
    %151 = vmatpush1.msra.mxu0 0.0
    %152 = vmatprep.subr.mxu0 0.0
    %153 = vmatpush1.msra.mxu0 0.0
    %154 = vmatprep.subr.mxu0 0.0
    %155 = vmatpush1.msra.mxu0 0.0
    %156 = vmatprep.subr.mxu0 0.0
    %157 = vmatpush1.msra.mxu0 0.0
    %158 = vmatprep.subr.mxu0 0.0
    %159 = vmatpush1.msra.mxu0 0.0
    %160 = vmatprep.subr.mxu0 0.0
    %161 = vmatpush1.msra.mxu0 0.0
    %162 = vmatprep.mubr.f32.mxu0 0.0
    %163 = vmatmul.mubr.f32.gmra.mrb[0].mxu0 %v96
    %v164 = vpop.f32.mrb[0].mxu0
    %v165 = vadd.f32 %v93, %v164
    %v166 = vpop.f32.mrb[0].mxu0
    %167 = vdwg.mxu0
    %v168 = vmax.f32 %v165, 0.0
    %v169 = vld [vmem:[#allocation7] sm:$0xff]
    %v170 = vld [vmem:[#allocation7 + $0x8] sm:$0xff]
    %v171 = vld [vmem:[#allocation7 + $0x10] sm:$0xff]
    %v172 = vld [vmem:[#allocation7 + $0x18] sm:$0xff]
    %v173 = vld [vmem:[#allocation7 + $0x20] sm:$0xff]
    %v174 = vld [vmem:[#allocation7 + $0x28] sm:$0xff]
    %v175 = vld [vmem:[#allocation7 + $0x30] sm:$0xff]
    %v176 = vld [vmem:[#allocation7 + $0x38] sm:$0xff]
    %v177 = vld [vmem:[#allocation7 + $0x40] sm:$0xff]
    %v178 = vld [vmem:[#allocation7 + $0x48] sm:$0xff]
    %v179 = vld [vmem:[#allocation7 + $0x50] sm:$0xff]
    %v180 = vld [vmem:[#allocation7 + $0x58] sm:$0xff]
    %v181 = vld [vmem:[#allocation7 + $0x60] sm:$0xff]
    %v182 = vld [vmem:[#allocation7 + $0x68] sm:$0xff]
    %v183 = vld [vmem:[#allocation7 + $0x70] sm:$0xff]
    %v184 = vld [vmem:[#allocation7 + $0x78] sm:$0xff]
    %v185 = vld [vmem:[%s5 + $0x1] ss:$0 sm:$0xff]
    %186 = vmatprep.subr.mxu0 0.0
    %187 = vmatpush1.msra.mxu0 %v169
    %188 = vmatprep.subr.mxu0 0.0
    %189 = vmatpush1.msra.mxu0 %v170
    %190 = vmatprep.subr.mxu0 0.0
    %191 = vmatpush1.msra.mxu0 %v171
    %192 = vmatprep.subr.mxu0 0.0
    %193 = vmatpush1.msra.mxu0 %v172
    %194 = vmatprep.subr.mxu0 0.0
    %195 = vmatpush1.msra.mxu0 %v173
    %196 = vmatprep.subr.mxu0 0.0
    %197 = vmatpush1.msra.mxu0 %v174
    %198 = vmatprep.subr.mxu0 0.0
    %199 = vmatpush1.msra.mxu0 %v175
    %200 = vmatprep.subr.mxu0 0.0
    %201 = vmatpush1.msra.mxu0 %v176
    %202 = vmatprep.subr.mxu0 0.0
    %203 = vmatpush1.msra.mxu0 %v177
    %204 = vmatprep.subr.mxu0 0.0
    %205 = vmatpush1.msra.mxu0 %v178
    %206 = vmatprep.subr.mxu0 0.0
    %207 = vmatpush1.msra.mxu0 %v179
    %208 = vmatprep.subr.mxu0 0.0
    %209 = vmatpush1.msra.mxu0 %v180
    %210 = vmatprep.subr.mxu0 0.0
    %211 = vmatpush1.msra.mxu0 %v181
    %212 = vmatprep.subr.mxu0 0.0
    %213 = vmatpush1.msra.mxu0 %v182
    %214 = vmatprep.subr.mxu0 0.0
    %215 = vmatpush1.msra.mxu0 %v183
    %216 = vmatprep.subr.mxu0 0.0
    %217 = vmatpush1.msra.mxu0 %v184
    %218 = vmatprep.subr.mxu0 0.0
    %219 = vmatpush1.msra.mxu0 0.0
    %220 = vmatprep.subr.mxu0 0.0
    %221 = vmatpush1.msra.mxu0 0.0
    %222 = vmatprep.subr.mxu0 0.0
    %223 = vmatpush1.msra.mxu0 0.0
    %224 = vmatprep.subr.mxu0 0.0
    %225 = vmatpush1.msra.mxu0 0.0
    %226 = vmatprep.subr.mxu0 0.0
    %227 = vmatpush1.msra.mxu0 0.0
    %228 = vmatprep.subr.mxu0 0.0
    %229 = vmatpush1.msra.mxu0 0.0
    %230 = vmatprep.subr.mxu0 0.0
    %231 = vmatpush1.msra.mxu0 0.0
    %232 = vmatprep.subr.mxu0 0.0
    %233 = vmatpush1.msra.mxu0 0.0
    %234 = vmatprep.subr.mxu0 0.0
    %235 = vmatpush1.msra.mxu0 0.0
    %236 = vmatprep.subr.mxu0 0.0
    %237 = vmatpush1.msra.mxu0 0.0
    %238 = vmatprep.subr.mxu0 0.0
    %239 = vmatpush1.msra.mxu0 0.0
    %240 = vmatprep.subr.mxu0 0.0
    %241 = vmatpush1.msra.mxu0 0.0
    %242 = vmatprep.subr.mxu0 0.0
    %243 = vmatpush1.msra.mxu0 0.0
    %244 = vmatprep.subr.mxu0 0.0
    %245 = vmatpush1.msra.mxu0 0.0
    %246 = vmatprep.subr.mxu0 0.0
    %247 = vmatpush1.msra.mxu0 0.0
    %248 = vmatprep.subr.mxu0 0.0
    %249 = vmatpush1.msra.mxu0 0.0
    %250 = vmatprep.mubr.f32.mxu0 0.0
    %251 = vmatmul.mubr.f32.gmra.mrb[0].mxu0 %v168
    %v252 = vpop.f32.mrb[0].mxu0
    %v253 = vadd.f32 %v185, %v252
    %v254 = vpop.f32.mrb[0].mxu0
    %255 = vdwg.mxu0
    %v256 = vmax.f32 %v253, 0.0
    %v257 = vld [vmem:[#allocation8] sm:$0xff]
    %v258 = vld [vmem:[#allocation8 + $0x8] sm:$0xff]
    %v259 = vld [vmem:[#allocation8 + $0x10] sm:$0xff]
    %v260 = vld [vmem:[#allocation8 + $0x18] sm:$0xff]
    %v261 = vld [vmem:[#allocation8 + $0x20] sm:$0xff]
    %v262 = vld [vmem:[#allocation8 + $0x28] sm:$0xff]
    %v263 = vld [vmem:[#allocation8 + $0x30] sm:$0xff]
    %v264 = vld [vmem:[#allocation8 + $0x38] sm:$0xff]
    %v265 = vld [vmem:[#allocation8 + $0x40] sm:$0xff]
    %v266 = vld [vmem:[#allocation8 + $0x48] sm:$0xff]
    %v267 = vld [vmem:[#allocation8 + $0x50] sm:$0xff]
    %v268 = vld [vmem:[#allocation8 + $0x58] sm:$0xff]
    %v269 = vld [vmem:[#allocation8 + $0x60] sm:$0xff]
    %v270 = vld [vmem:[#allocation8 + $0x68] sm:$0xff]
    %v271 = vld [vmem:[#allocation8 + $0x70] sm:$0xff]
    %v272 = vld [vmem:[#allocation8 + $0x78] sm:$0xff]
    %v273 = vld [vmem:[#allocation8 + $0x80] sm:$0xff]
    %v274 = vld [vmem:[#allocation8 + $0x88] sm:$0xff]
    %v275 = vld [vmem:[#allocation8 + $0x90] sm:$0xff]
    %v276 = vld [vmem:[#allocation8 + $0x98] sm:$0xff]
    %v277 = vld [vmem:[#allocation8 + $0xa0] sm:$0xff]
    %v278 = vld [vmem:[#allocation8 + $0xa8] sm:$0xff]
    %v279 = vld [vmem:[#allocation8 + $0xb0] sm:$0xff]
    %v280 = vld [vmem:[#allocation8 + $0xb8] sm:$0xff]
    %v281 = vld [vmem:[#allocation8 + $0xc0] sm:$0xff]
    %v282 = vld [vmem:[#allocation8 + $0xc8] sm:$0xff]
    %v283 = vld [vmem:[#allocation8 + $0xd0] sm:$0xff]
    %v284 = vld [vmem:[#allocation8 + $0xd8] sm:$0xff]
    %v285 = vld [vmem:[#allocation8 + $0xe0] sm:$0xff]
    %v286 = vld [vmem:[#allocation8 + $0xe8] sm:$0xff]
    %v287 = vld [vmem:[#allocation8 + $0xf0] sm:$0xff]
    %v288 = vld [vmem:[#allocation8 + $0xf8] sm:$0xff]
    %s289 = scalar_lea.vmem %s5, 2
    %v290 = vld [vmem:[%s289] ss:$8 sm:$0x3]
    %v292 = vlaneseq
    %v293 = vshrl.u32 %v292, 7
    %v294 = vsub.s32 0, %v293
    %v295 = vrot.slane %v290, %v294
    %v296 = vlaneseq
    %v297 = vshrl.u32 %v296, 7
    %v298 = vsub.s32 1, %v297
    %v299 = vrot.slane %v290, %v298
    %302 = vmatprep.subr.mxu0 %v258
    %303 = vmatpush1.msra.mxu0 %v257
    %304 = vmatprep.subr.mxu0 %v260
    %305 = vmatpush1.msra.mxu0 %v259
    %306 = vmatprep.subr.mxu0 %v262
    %307 = vmatpush1.msra.mxu0 %v261
    %308 = vmatprep.subr.mxu0 %v264
    %309 = vmatpush1.msra.mxu0 %v263
    %310 = vmatprep.subr.mxu0 %v266
    %311 = vmatpush1.msra.mxu0 %v265
    %312 = vmatprep.subr.mxu0 %v268
    %313 = vmatpush1.msra.mxu0 %v267
    %314 = vmatprep.subr.mxu0 %v270
    %315 = vmatpush1.msra.mxu0 %v269
    %316 = vmatprep.subr.mxu0 %v272
    %317 = vmatpush1.msra.mxu0 %v271
    %318 = vmatprep.subr.mxu0 %v274
    %319 = vmatpush1.msra.mxu0 %v273
    %320 = vmatprep.subr.mxu0 %v276
    %321 = vmatpush1.msra.mxu0 %v275
    %322 = vmatprep.subr.mxu0 %v278
    %323 = vmatpush1.msra.mxu0 %v277
    %324 = vmatprep.subr.mxu0 %v280
    %325 = vmatpush1.msra.mxu0 %v279
    %326 = vmatprep.subr.mxu0 %v282
    %327 = vmatpush1.msra.mxu0 %v281
    %328 = vmatprep.subr.mxu0 %v284
    %329 = vmatpush1.msra.mxu0 %v283
    %330 = vmatprep.subr.mxu0 %v286
    %331 = vmatpush1.msra.mxu0 %v285
    %332 = vmatprep.subr.mxu0 %v288
    %333 = vmatpush1.msra.mxu0 %v287
    %334 = vmatprep.subr.mxu0 0.0
    %335 = vmatpush1.msra.mxu0 0.0
    %336 = vmatprep.subr.mxu0 0.0
    %337 = vmatpush1.msra.mxu0 0.0
    %338 = vmatprep.subr.mxu0 0.0
    %339 = vmatpush1.msra.mxu0 0.0
    %340 = vmatprep.subr.mxu0 0.0
    %341 = vmatpush1.msra.mxu0 0.0
    %342 = vmatprep.subr.mxu0 0.0
    %343 = vmatpush1.msra.mxu0 0.0
    %344 = vmatprep.subr.mxu0 0.0
    %345 = vmatpush1.msra.mxu0 0.0
    %346 = vmatprep.subr.mxu0 0.0
    %347 = vmatpush1.msra.mxu0 0.0
    %348 = vmatprep.subr.mxu0 0.0
    %349 = vmatpush1.msra.mxu0 0.0
    %350 = vmatprep.subr.mxu0 0.0
    %351 = vmatpush1.msra.mxu0 0.0
    %352 = vmatprep.subr.mxu0 0.0
    %353 = vmatpush1.msra.mxu0 0.0
    %354 = vmatprep.subr.mxu0 0.0
    %355 = vmatpush1.msra.mxu0 0.0
    %356 = vmatprep.subr.mxu0 0.0
    %357 = vmatpush1.msra.mxu0 0.0
    %358 = vmatprep.subr.mxu0 0.0
    %359 = vmatpush1.msra.mxu0 0.0
    %360 = vmatprep.subr.mxu0 0.0
    %361 = vmatpush1.msra.mxu0 0.0
    %362 = vmatprep.subr.mxu0 0.0
    %363 = vmatpush1.msra.mxu0 0.0
    %364 = vmatprep.subr.mxu0 0.0
    %365 = vmatpush1.msra.mxu0 0.0
    %366 = vmatprep.mubr.f32.mxu0 0.0
    %367 = vmatmul.mubr.f32.gmra.mrb[0].mxu0 %v256
    %v368 = vpop.f32.mrb[0].mxu0
    %v369 = vadd.f32 %v295, %v368
    %v370 = vpop.f32.mrb[0].mxu0
    %v371 = vadd.f32 %v299, %v370
    %372 = vdwg.mxu0
    %v373 = vmax.f32 %v369, 0.0
    %v374 = vmax.f32 %v371, 0.0
    %v375 = vld [vmem:[#allocation10] sm:$0xff]
    %v376 = vld [vmem:[#allocation10 + $0x8] sm:$0xff]
    %v377 = vld [vmem:[#allocation10 + $0x10] sm:$0xff]
    %v378 = vld [vmem:[#allocation10 + $0x18] sm:$0xff]
    %v379 = vld [vmem:[#allocation10 + $0x20] sm:$0xff]
    %v380 = vld [vmem:[#allocation10 + $0x28] sm:$0xff]
    %v381 = vld [vmem:[#allocation10 + $0x30] sm:$0xff]
    %v382 = vld [vmem:[#allocation10 + $0x38] sm:$0xff]
    %v383 = vld [vmem:[#allocation10 + $0x40] sm:$0xff]
    %v384 = vld [vmem:[#allocation10 + $0x48] sm:$0xff]
    %v385 = vld [vmem:[#allocation10 + $0x50] sm:$0xff]
    %v386 = vld [vmem:[#allocation10 + $0x58] sm:$0xff]
    %v387 = vld [vmem:[#allocation10 + $0x60] sm:$0xff]
    %v388 = vld [vmem:[#allocation10 + $0x68] sm:$0xff]
    %v389 = vld [vmem:[#allocation10 + $0x70] sm:$0xff]
    %v390 = vld [vmem:[#allocation10 + $0x78] sm:$0xff]
    %v391 = vld [vmem:[#allocation10 + $0x80] sm:$0xff]
    %v392 = vld [vmem:[#allocation10 + $0x88] sm:$0xff]
    %v393 = vld [vmem:[#allocation10 + $0x90] sm:$0xff]
    %v394 = vld [vmem:[#allocation10 + $0x98] sm:$0xff]
    %v395 = vld [vmem:[#allocation10 + $0xa0] sm:$0xff]
    %v396 = vld [vmem:[#allocation10 + $0xa8] sm:$0xff]
    %v397 = vld [vmem:[#allocation10 + $0xb0] sm:$0xff]
    %v398 = vld [vmem:[#allocation10 + $0xb8] sm:$0xff]
    %v399 = vld [vmem:[#allocation10 + $0xc0] sm:$0xff]
    %v400 = vld [vmem:[#allocation10 + $0xc8] sm:$0xff]
    %v401 = vld [vmem:[#allocation10 + $0xd0] sm:$0xff]
    %v402 = vld [vmem:[#allocation10 + $0xd8] sm:$0xff]
    %v403 = vld [vmem:[#allocation10 + $0xe0] sm:$0xff]
    %v404 = vld [vmem:[#allocation10 + $0xe8] sm:$0xff]
    %v405 = vld [vmem:[#allocation10 + $0xf0] sm:$0xff]
    %v406 = vld [vmem:[#allocation10 + $0xf8] sm:$0xff]
    %v407 = vld [vmem:[%s5 + $0x3] ss:$0 sm:$0xff]
    %408 = vmatprep.subr.mxu0 0.0
    %409 = vmatpush1.msra.mxu0 %v375
    %410 = vmatprep.subr.mxu0 0.0
    %411 = vmatpush1.msra.mxu0 %v376
    %412 = vmatprep.subr.mxu0 0.0
    %413 = vmatpush1.msra.mxu0 %v377
    %414 = vmatprep.subr.mxu0 0.0
    %415 = vmatpush1.msra.mxu0 %v378
    %416 = vmatprep.subr.mxu0 0.0
    %417 = vmatpush1.msra.mxu0 %v379
    %418 = vmatprep.subr.mxu0 0.0
    %419 = vmatpush1.msra.mxu0 %v380
    %420 = vmatprep.subr.mxu0 0.0
    %421 = vmatpush1.msra.mxu0 %v381
    %422 = vmatprep.subr.mxu0 0.0
    %423 = vmatpush1.msra.mxu0 %v382
    %424 = vmatprep.subr.mxu0 0.0
    %425 = vmatpush1.msra.mxu0 %v383
    %426 = vmatprep.subr.mxu0 0.0
    %427 = vmatpush1.msra.mxu0 %v384
    %428 = vmatprep.subr.mxu0 0.0
    %429 = vmatpush1.msra.mxu0 %v385
    %430 = vmatprep.subr.mxu0 0.0
    %431 = vmatpush1.msra.mxu0 %v386
    %432 = vmatprep.subr.mxu0 0.0
    %433 = vmatpush1.msra.mxu0 %v387
    %434 = vmatprep.subr.mxu0 0.0
    %435 = vmatpush1.msra.mxu0 %v388
    %436 = vmatprep.subr.mxu0 0.0
    %437 = vmatpush1.msra.mxu0 %v389
    %438 = vmatprep.subr.mxu0 0.0
    %439 = vmatpush1.msra.mxu0 %v390
    %440 = vmatprep.subr.mxu0 0.0
    %441 = vmatpush1.msra.mxu0 %v391
    %442 = vmatprep.subr.mxu0 0.0
    %443 = vmatpush1.msra.mxu0 %v392
    %444 = vmatprep.subr.mxu0 0.0
    %445 = vmatpush1.msra.mxu0 %v393
    %446 = vmatprep.subr.mxu0 0.0
    %447 = vmatpush1.msra.mxu0 %v394
    %448 = vmatprep.subr.mxu0 0.0
    %449 = vmatpush1.msra.mxu0 %v395
    %450 = vmatprep.subr.mxu0 0.0
    %451 = vmatpush1.msra.mxu0 %v396
    %452 = vmatprep.subr.mxu0 0.0
    %453 = vmatpush1.msra.mxu0 %v397
    %454 = vmatprep.subr.mxu0 0.0
    %455 = vmatpush1.msra.mxu0 %v398
    %456 = vmatprep.subr.mxu0 0.0
    %457 = vmatpush1.msra.mxu0 %v399
    %458 = vmatprep.subr.mxu0 0.0
    %459 = vmatpush1.msra.mxu0 %v400
    %460 = vmatprep.subr.mxu0 0.0
    %461 = vmatpush1.msra.mxu0 %v401
    %462 = vmatprep.subr.mxu0 0.0
    %463 = vmatpush1.msra.mxu0 %v402
    %464 = vmatprep.subr.mxu0 0.0
    %465 = vmatpush1.msra.mxu0 %v403
    %466 = vmatprep.subr.mxu0 0.0
    %467 = vmatpush1.msra.mxu0 %v404
    %468 = vmatprep.subr.mxu0 0.0
    %469 = vmatpush1.msra.mxu0 %v405
    %470 = vmatprep.subr.mxu0 0.0
    %471 = vmatpush1.msra.mxu0 %v406
    %472 = vmatprep.mubr.f32.mxu0 %v374
    %473 = vmatmul.mubr.f32.gmra.mrb[0].mxu0 %v373
    %v474 = vpop.f32.mrb[0].mxu0
    %v475 = vadd.f32 %v407, %v474
    %v476 = vpop.f32.mrb[0].mxu0
    %477 = vdwg.mxu0
    %478 = vxpose.xlu0.b32.start [1/16] %v475, 128
    %479 = vxpose.xlu0.b32.cont [2/16] 0.0, 128
    %480 = vxpose.xlu0.b32.cont [3/16] 0.0, 128
    %481 = vxpose.xlu0.b32.cont [4/16] 0.0, 128
    %482 = vxpose.xlu0.b32.cont [5/16] 0.0, 128
    %483 = vxpose.xlu0.b32.cont [6/16] 0.0, 128
    %484 = vxpose.xlu0.b32.cont [7/16] 0.0, 128
    %485 = vxpose.xlu0.b32.cont [8/16] 0.0, 128
    %486 = vxpose.xlu0.b32.cont [9/16] 0.0, 128
    %487 = vxpose.xlu0.b32.cont [10/16] 0.0, 128
    %488 = vxpose.xlu0.b32.cont [11/16] 0.0, 128
    %489 = vxpose.xlu0.b32.cont [12/16] 0.0, 128
    %490 = vxpose.xlu0.b32.cont [13/16] 0.0, 128
    %491 = vxpose.xlu0.b32.cont [14/16] 0.0, 128
    %492 = vxpose.xlu0.b32.cont [15/16] 0.0, 128
    %493 = vxpose.xlu0.b32.end [16/16] 0.0, 128
    %v494 = vpop.trf.xlu0
    %v495 = vpop.trf.xlu0
    %v496 = vpop.trf.xlu0
    %v497 = vpop.trf.xlu0
    %v498 = vpop.trf.xlu0
    %v499 = vpop.trf.xlu0
    %v500 = vpop.trf.xlu0
    %v501 = vpop.trf.xlu0
    %v502 = vpop.trf.xlu0
    %v503 = vpop.trf.xlu0
    %v504 = vpop.trf.xlu0
    %v505 = vpop.trf.xlu0
    %v506 = vpop.trf.xlu0
    %v507 = vpop.trf.xlu0
    %v508 = vpop.trf.xlu0
    %v509 = vpop.trf.xlu0
    %vm510 = vcmask 64512
    %511 = vst.msk [vmem:[#allocation11] sm:$0xff] %vm510, %v494
    // Predicated region
    $region46: #{tpu_custom_call.1} parent=1 // pred_check
      _
    $region47: #{tpu_custom_call.1} parent=1 // pred_check_branch
      %513 = sbr.rel (0) target = $region49
    $region48: #{tpu_custom_call.1} parent=1 // pred_region
      %s515 = ssub.s32 128, 128
      %516 = vsyncadd [#allocation4], %s515
      %s518 = sshll.u32 [#allocation11], 4
      %s519 = int_to_ptr.vmem [resolvable:$true] %s518
      %521 = dma.vmem_to_hbm [thread:$0]  %s519, 128, %s6, [#allocation4]
    $region49: #{tpu_custom_call.1} parent=1 // pred_fallthru
      _
    // Predicated region
    $region50: #{tpu_custom_call.1} parent=1 // pred_check
      _
    $region51: #{tpu_custom_call.1} parent=1 // pred_check_branch
      %523 = sbr.rel (0) target = $region53
    $region52: #{tpu_custom_call.1} parent=1 // pred_region
      %524 = dma.done [#allocation4], 128
    $region53: #{tpu_custom_call.1} parent=1 // pred_fallthru
      _
    %525 = vsyncpa [#allocation3], 1
    %526 = vsyncpa [#allocation6], 1
    %527 = vsyncpa [#allocation9], 1
    %528 = vsyncpa [#allocation4], 1

</llo_original>
